<compile_context>
chip_gen: v7x
topology: tpu7x:2x2x1
jax: 0.10.0
libtpu: 0.0.40
codegen_flags: <defaults>
</compile_context>

<pallas_src>
import functools

import jax
import jax.numpy as jnp
import numpy as np
from jax.experimental import pallas as pl
from jax.experimental.pallas import tpu as pltpu


def _round_up(x, m):
    return (x + m - 1) // m * m


# For output sub-position offset d (0/1) and effective-tap index t (0/1), which
# original 3x3 kernel rows/cols collapse onto that tap, and which padded input
# offset (0/1/2 == original offset -1/0/+1) the tap reads.
_TAPS = {(0, 0): (0,), (0, 1): (1, 2), (1, 0): (0, 1), (1, 1): (2,)}   # (d, t) -> ki/kj list
_GROUPS = {0: ((0, 0),), 1: ((0, 1), (1, 0)), 2: ((1, 1),)}           # pad offset -> (d, t) list


def _final_layer_kernel(x_ref, w_ref, b_ref, o_ref, *, wp, l_slab):
    # x_ref: (1, Cin, Lp_pad)  bf16  row-major-flattened, zero-padded ORIGINAL-res input
    # w_ref: (16, Cout, Cin)   bf16  effective sub-pixel tap weights
    # b_ref: (Cout, 1)         f32   bias (broadcast along lanes)
    # o_ref: (1, 4, Cout, l_slab) f32  4 de-interleaved sub-plane slabs (padded-width coords)
    cout = o_ref.shape[2]
    accs = [jnp.zeros((cout, l_slab), jnp.float32) for _ in range(4)]

    # 9 distinct shifted slices of the flat input (like a plain 3x3 conv at low
    # resolution); each slice feeds 1/2/4 of the 16 effective taps.
    for ra in range(3):
        for ca in range(3):
            off = ra * wp + ca                                   # static flat offset
            x_sl = x_ref[0, :, pl.ds(off, l_slab)]               # (Cin, l_slab) bf16
            for di, a in _GROUPS[ra]:
                for dj, b in _GROUPS[ca]:
                    s = di * 2 + dj
                    t = (s * 2 + a) * 2 + b
                    # bf16 x bf16 -> f32 accumulate on the MXU.
                    accs[s] = accs[s] + jnp.dot(
                        w_ref[t], x_sl, preferred_element_type=jnp.float32)

    bias = b_ref[...]                                            # (Cout, 1)
    for s in range(4):
        y = jnp.tanh(accs[s] + bias)                             # EUP tanh
        o_ref[0, s] = y.astype(o_ref.dtype)                      # lane-dense store


def final_layer_forward(x, weight, bias, skip_input=None):
    """x: (N, Cx, H, W); optional skip_input: (N, Cs, H, W) concatenated on channels.
    weight: (Cout, Cin, 3, 3); bias: (Cout,).  Cin = Cx (+ Cs if skip given).
    Returns (N, Cout, 2H, 2W), matching
        nn.Upsample(scale_factor=2) -> nn.Conv2d(Cin, Cout, 3, padding=1) -> nn.Tanh().
    """
    if skip_input is not None:
        x = jnp.concatenate([x, skip_input], axis=1)
    N, Cin, H, W = x.shape
    Cout, Cin_w, kh, kw = weight.shape
    assert Cin_w == Cin, (Cin_w, Cin)
    assert (kh, kw) == (3, 3), (kh, kw)
    pad = 1

    Hp, Wp = H + 2 * pad, W + 2 * pad
    Ho, Wo = 2 * H, 2 * W

    # --- wrapper glue (single cheap XLA pass): pad original-res input, flatten
    # row-major, pad the flat axis so every tap's shifted slice stays in bounds
    # and the slab length is 128-lane aligned, cast to bf16. ---
    x_pad = jnp.pad(x, ((0, 0), (0, 0), (pad, pad), (pad, pad)))
    L_slab = _round_up(H * Wp, 128)                       # flat sub-plane slab length
    max_off = 2 * Wp + 2
    Lp_pad = _round_up(max(max_off + L_slab, Hp * Wp), 128)
    x_flat = x_pad.reshape(N, Cin, Hp * Wp)
    x_flat = jnp.pad(x_flat, ((0, 0), (0, 0), (0, Lp_pad - Hp * Wp)))
    x_flat = x_flat.astype(jnp.bfloat16)

    # Effective sub-pixel weights: W_eff[di,dj,a,b] = sum of the original 3x3
    # taps that land on original-input offset (a,b) for sub-position (di,dj).
    taps = []
    for di in range(2):
        for dj in range(2):
            for a in range(2):
                for b in range(2):
                    wt = sum(weight[:, :, ki, kj]
                             for ki in _TAPS[(di, a)] for kj in _TAPS[(dj, b)])
                    taps.append(wt)
    w_taps = jnp.stack(taps, axis=0).astype(jnp.bfloat16)     # (16, Cout, Cin)
    b_col = bias.reshape(Cout, 1).astype(jnp.float32)

    kernel = functools.partial(_final_layer_kernel, wp=Wp, l_slab=L_slab)

    out = pl.pallas_call(
        kernel,
        out_shape=jax.ShapeDtypeStruct((N, 4, Cout, L_slab), jnp.float32),
        grid_spec=pltpu.PrefetchScalarGridSpec(
            num_scalar_prefetch=0,
            grid=(N,),
            in_specs=[
                pl.BlockSpec((1, Cin, Lp_pad), lambda n: (n, 0, 0)),
                pl.BlockSpec((16, Cout, Cin), lambda n: (0, 0, 0)),
                pl.BlockSpec((Cout, 1), lambda n: (0, 0)),
            ],
            out_specs=pl.BlockSpec((1, 4, Cout, L_slab), lambda n: (n, 0, 0, 0)),
        ),
        compiler_params=pltpu.CompilerParams(
            dimension_semantics=("parallel",),
        ),
    )(x_flat, w_taps, b_col)

    # Depth-to-space on the tiny Cout output:
    # (N, di, dj, Cout, H, W) -> (N, Cout, H, di, W, dj) -> (N, Cout, 2H, 2W).
    y4 = out[:, :, :, : H * Wp].reshape(N, 2, 2, Cout, H, Wp)[:, :, :, :, :, :W]
    y = y4.transpose(0, 3, 4, 1, 5, 2).reshape(N, Cout, Ho, Wo)
    return y


def _reference(x, weight, bias, skip_input=None):
    if skip_input is not None:
        x = jnp.concatenate([x, skip_input], axis=1)
    xu = jnp.repeat(jnp.repeat(x, 2, axis=2), 2, axis=3)
    y = jax.lax.conv_general_dilated(
        xu, weight, window_strides=(1, 1), padding=((1, 1), (1, 1)),
        dimension_numbers=("NCHW", "OIHW", "NCHW"))
    return jnp.tanh(y + bias.reshape(1, -1, 1, 1))


if __name__ == "__main__":
    # Small deterministic config: FinalLayer(in_channels=8, out_channels=3),
    # where the 8 input channels come from concat(x[4ch], skip[4ch]).
    N, Cx, Cs, H, W = 2, 4, 4, 16, 16
    Cin, Cout, ksize = Cx + Cs, 3, 3

    key = jax.random.PRNGKey(0)
    kx, ks, kw, kb = jax.random.split(key, 4)

    x = jax.random.normal(kx, (N, Cx, H, W), dtype=jnp.float32)
    skip = jax.random.normal(ks, (N, Cs, H, W), dtype=jnp.float32)
    fan_in = Cin * ksize * ksize
    bound = 1.0 / (fan_in ** 0.5)
    weight = jax.random.uniform(kw, (Cout, Cin, ksize, ksize), jnp.float32, -bound, bound)
    bias = jax.random.uniform(kb, (Cout,), jnp.float32, -bound, bound)

    y = final_layer_forward(x, weight, bias, skip_input=skip)
    jax.block_until_ready(y)

    assert y.shape == (N, Cout, 2 * H, 2 * W), y.shape

    y_ref = _reference(x, weight, bias, skip_input=skip)
    jax.block_until_ready(y_ref)
    assert np.allclose(np.asarray(y), np.asarray(y_ref), atol=2e-2, rtol=2e-2), (
        float(np.max(np.abs(np.asarray(y) - np.asarray(y_ref)))))

    print("KERNEL_OK")
</pallas_src>

<mosaic_0001>
module attributes {stable_mosaic.version = 11 : i64} {
  func.func @_final_layer_kernel(%arg0: i32, %arg1: memref<1x8x512xbf16, #tpu.memory_space<vmem>>, %arg2: memref<16x3x8xbf16, #tpu.memory_space<vmem>>, %arg3: memref<3x1xf32, #tpu.memory_space<vmem>>, %arg4: memref<1x4x3x384xf32, #tpu.memory_space<vmem>>) attributes {dimension_semantics = [#tpu.dimension_semantics<parallel>], iteration_bounds = array<i64: 2>, scalar_prefetch = 0 : i64, scratch_operands = 0 : i64, tpu.core_type = #tpu.core_type<tc>, window_params = [{transform_indices = @transform_0, window_bounds = array<i64: 1, 8, 512>}, {pipeline_mode = #tpu.pipeline_mode<synchronous>, transform_indices = @transform_1, window_bounds = array<i64: 16, 3, 8>}, {pipeline_mode = #tpu.pipeline_mode<synchronous>, transform_indices = @transform_2, window_bounds = array<i64: 3, 1>}, {transform_indices = @transform_3, window_bounds = array<i64: 1, 4, 3, 384>}]} {
    %cst = arith.constant 0.000000e+00 : f32
    %0 = vector.broadcast %cst : f32 to vector<3x384xf32>
    %cst_0 = arith.constant 0.000000e+00 : f32
    %1 = vector.broadcast %cst_0 : f32 to vector<3x384xf32>
    %cst_1 = arith.constant 0.000000e+00 : f32
    %2 = vector.broadcast %cst_1 : f32 to vector<3x384xf32>
    %cst_2 = arith.constant 0.000000e+00 : f32
    %3 = vector.broadcast %cst_2 : f32 to vector<3x384xf32>
    %c0 = arith.constant 0 : index
    %c0_3 = arith.constant 0 : index
    %c0_4 = arith.constant 0 : index
    %4 = vector.load %arg1[%c0, %c0_3, %c0_4] : memref<1x8x512xbf16, #tpu.memory_space<vmem>>, vector<1x8x384xbf16>
    %5 = vector.shape_cast %4 : vector<1x8x384xbf16> to vector<8x384xbf16>
    %c0_5 = arith.constant 0 : index
    %c0_6 = arith.constant 0 : index
    %c0_7 = arith.constant 0 : index
    %6 = vector.load %arg2[%c0_5, %c0_6, %c0_7] : memref<16x3x8xbf16, #tpu.memory_space<vmem>>, vector<1x3x8xbf16>
    %7 = vector.shape_cast %6 : vector<1x3x8xbf16> to vector<3x8xbf16>
    %cst_8 = arith.constant dense<0.000000e+00> : vector<3x384xf32>
    %8 = tpu.matmul %7, %5, %cst_8 {dimension_numbers = #tpu.dot_dimension_numbers<[1], [0], [0], [1], [0, 0, 1, 1], [], []>} : vector<3x8xbf16>, vector<8x384xbf16>, vector<3x384xf32> -> vector<3x384xf32>
    %9 = arith.addf %0, %8 : vector<3x384xf32>
    %c0_9 = arith.constant 0 : index
    %c0_10 = arith.constant 0 : index
    %c1 = arith.constant 1 : index
    %10 = vector.load %arg1[%c0_9, %c0_10, %c1] : memref<1x8x512xbf16, #tpu.memory_space<vmem>>, vector<1x8x384xbf16>
    %11 = vector.shape_cast %10 : vector<1x8x384xbf16> to vector<8x384xbf16>
    %c1_11 = arith.constant 1 : index
    %c0_12 = arith.constant 0 : index
    %c0_13 = arith.constant 0 : index
    %12 = vector.load %arg2[%c1_11, %c0_12, %c0_13] : memref<16x3x8xbf16, #tpu.memory_space<vmem>>, vector<1x3x8xbf16>
    %13 = vector.shape_cast %12 : vector<1x3x8xbf16> to vector<3x8xbf16>
    %cst_14 = arith.constant dense<0.000000e+00> : vector<3x384xf32>
    %14 = tpu.matmul %13, %11, %cst_14 {dimension_numbers = #tpu.dot_dimension_numbers<[1], [0], [0], [1], [0, 0, 1, 1], [], []>} : vector<3x8xbf16>, vector<8x384xbf16>, vector<3x384xf32> -> vector<3x384xf32>
    %15 = arith.addf %9, %14 : vector<3x384xf32>
    %c4 = arith.constant 4 : index
    %c0_15 = arith.constant 0 : index
    %c0_16 = arith.constant 0 : index
    %16 = vector.load %arg2[%c4, %c0_15, %c0_16] : memref<16x3x8xbf16, #tpu.memory_space<vmem>>, vector<1x3x8xbf16>
    %17 = vector.shape_cast %16 : vector<1x3x8xbf16> to vector<3x8xbf16>
    %cst_17 = arith.constant dense<0.000000e+00> : vector<3x384xf32>
    %18 = tpu.matmul %17, %11, %cst_17 {dimension_numbers = #tpu.dot_dimension_numbers<[1], [0], [0], [1], [0, 0, 1, 1], [], []>} : vector<3x8xbf16>, vector<8x384xbf16>, vector<3x384xf32> -> vector<3x384xf32>
    %19 = arith.addf %1, %18 : vector<3x384xf32>
    %c0_18 = arith.constant 0 : index
    %c0_19 = arith.constant 0 : index
    %c2 = arith.constant 2 : index
    %20 = vector.load %arg1[%c0_18, %c0_19, %c2] : memref<1x8x512xbf16, #tpu.memory_space<vmem>>, vector<1x8x384xbf16>
    %21 = vector.shape_cast %20 : vector<1x8x384xbf16> to vector<8x384xbf16>
    %c5 = arith.constant 5 : index
    %c0_20 = arith.constant 0 : index
    %c0_21 = arith.constant 0 : index
    %22 = vector.load %arg2[%c5, %c0_20, %c0_21] : memref<16x3x8xbf16, #tpu.memory_space<vmem>>, vector<1x3x8xbf16>
    %23 = vector.shape_cast %22 : vector<1x3x8xbf16> to vector<3x8xbf16>
    %cst_22 = arith.constant dense<0.000000e+00> : vector<3x384xf32>
    %24 = tpu.matmul %23, %21, %cst_22 {dimension_numbers = #tpu.dot_dimension_numbers<[1], [0], [0], [1], [0, 0, 1, 1], [], []>} : vector<3x8xbf16>, vector<8x384xbf16>, vector<3x384xf32> -> vector<3x384xf32>
    %25 = arith.addf %19, %24 : vector<3x384xf32>
    %c0_23 = arith.constant 0 : index
    %c0_24 = arith.constant 0 : index
    %c18 = arith.constant 18 : index
    %26 = vector.load %arg1[%c0_23, %c0_24, %c18] : memref<1x8x512xbf16, #tpu.memory_space<vmem>>, vector<1x8x384xbf16>
    %27 = vector.shape_cast %26 : vector<1x8x384xbf16> to vector<8x384xbf16>
    %c2_25 = arith.constant 2 : index
    %c0_26 = arith.constant 0 : index
    %c0_27 = arith.constant 0 : index
    %28 = vector.load %arg2[%c2_25, %c0_26, %c0_27] : memref<16x3x8xbf16, #tpu.memory_space<vmem>>, vector<1x3x8xbf16>
    %29 = vector.shape_cast %28 : vector<1x3x8xbf16> to vector<3x8xbf16>
    %cst_28 = arith.constant dense<0.000000e+00> : vector<3x384xf32>
    %30 = tpu.matmul %29, %27, %cst_28 {dimension_numbers = #tpu.dot_dimension_numbers<[1], [0], [0], [1], [0, 0, 1, 1], [], []>} : vector<3x8xbf16>, vector<8x384xbf16>, vector<3x384xf32> -> vector<3x384xf32>
    %31 = arith.addf %15, %30 : vector<3x384xf32>
    %c8 = arith.constant 8 : index
    %c0_29 = arith.constant 0 : index
    %c0_30 = arith.constant 0 : index
    %32 = vector.load %arg2[%c8, %c0_29, %c0_30] : memref<16x3x8xbf16, #tpu.memory_space<vmem>>, vector<1x3x8xbf16>
    %33 = vector.shape_cast %32 : vector<1x3x8xbf16> to vector<3x8xbf16>
    %cst_31 = arith.constant dense<0.000000e+00> : vector<3x384xf32>
    %34 = tpu.matmul %33, %27, %cst_31 {dimension_numbers = #tpu.dot_dimension_numbers<[1], [0], [0], [1], [0, 0, 1, 1], [], []>} : vector<3x8xbf16>, vector<8x384xbf16>, vector<3x384xf32> -> vector<3x384xf32>
    %35 = arith.addf %2, %34 : vector<3x384xf32>
    %c0_32 = arith.constant 0 : index
    %c0_33 = arith.constant 0 : index
    %c19 = arith.constant 19 : index
    %36 = vector.load %arg1[%c0_32, %c0_33, %c19] : memref<1x8x512xbf16, #tpu.memory_space<vmem>>, vector<1x8x384xbf16>
    %37 = vector.shape_cast %36 : vector<1x8x384xbf16> to vector<8x384xbf16>
    %c3 = arith.constant 3 : index
    %c0_34 = arith.constant 0 : index
    %c0_35 = arith.constant 0 : index
    %38 = vector.load %arg2[%c3, %c0_34, %c0_35] : memref<16x3x8xbf16, #tpu.memory_space<vmem>>, vector<1x3x8xbf16>
    %39 = vector.shape_cast %38 : vector<1x3x8xbf16> to vector<3x8xbf16>
    %cst_36 = arith.constant dense<0.000000e+00> : vector<3x384xf32>
    %40 = tpu.matmul %39, %37, %cst_36 {dimension_numbers = #tpu.dot_dimension_numbers<[1], [0], [0], [1], [0, 0, 1, 1], [], []>} : vector<3x8xbf16>, vector<8x384xbf16>, vector<3x384xf32> -> vector<3x384xf32>
    %41 = arith.addf %31, %40 : vector<3x384xf32>
    %c6 = arith.constant 6 : index
    %c0_37 = arith.constant 0 : index
    %c0_38 = arith.constant 0 : index
    %42 = vector.load %arg2[%c6, %c0_37, %c0_38] : memref<16x3x8xbf16, #tpu.memory_space<vmem>>, vector<1x3x8xbf16>
    %43 = vector.shape_cast %42 : vector<1x3x8xbf16> to vector<3x8xbf16>
    %cst_39 = arith.constant dense<0.000000e+00> : vector<3x384xf32>
    %44 = tpu.matmul %43, %37, %cst_39 {dimension_numbers = #tpu.dot_dimension_numbers<[1], [0], [0], [1], [0, 0, 1, 1], [], []>} : vector<3x8xbf16>, vector<8x384xbf16>, vector<3x384xf32> -> vector<3x384xf32>
    %45 = arith.addf %25, %44 : vector<3x384xf32>
    %c9 = arith.constant 9 : index
    %c0_40 = arith.constant 0 : index
    %c0_41 = arith.constant 0 : index
    %46 = vector.load %arg2[%c9, %c0_40, %c0_41] : memref<16x3x8xbf16, #tpu.memory_space<vmem>>, vector<1x3x8xbf16>
    %47 = vector.shape_cast %46 : vector<1x3x8xbf16> to vector<3x8xbf16>
    %cst_42 = arith.constant dense<0.000000e+00> : vector<3x384xf32>
    %48 = tpu.matmul %47, %37, %cst_42 {dimension_numbers = #tpu.dot_dimension_numbers<[1], [0], [0], [1], [0, 0, 1, 1], [], []>} : vector<3x8xbf16>, vector<8x384xbf16>, vector<3x384xf32> -> vector<3x384xf32>
    %49 = arith.addf %35, %48 : vector<3x384xf32>
    %c12 = arith.constant 12 : index
    %c0_43 = arith.constant 0 : index
    %c0_44 = arith.constant 0 : index
    %50 = vector.load %arg2[%c12, %c0_43, %c0_44] : memref<16x3x8xbf16, #tpu.memory_space<vmem>>, vector<1x3x8xbf16>
    %51 = vector.shape_cast %50 : vector<1x3x8xbf16> to vector<3x8xbf16>
    %cst_45 = arith.constant dense<0.000000e+00> : vector<3x384xf32>
    %52 = tpu.matmul %51, %37, %cst_45 {dimension_numbers = #tpu.dot_dimension_numbers<[1], [0], [0], [1], [0, 0, 1, 1], [], []>} : vector<3x8xbf16>, vector<8x384xbf16>, vector<3x384xf32> -> vector<3x384xf32>
    %53 = arith.addf %3, %52 : vector<3x384xf32>
    %c0_46 = arith.constant 0 : index
    %c0_47 = arith.constant 0 : index
    %c20 = arith.constant 20 : index
    %54 = vector.load %arg1[%c0_46, %c0_47, %c20] : memref<1x8x512xbf16, #tpu.memory_space<vmem>>, vector<1x8x384xbf16>
    %55 = vector.shape_cast %54 : vector<1x8x384xbf16> to vector<8x384xbf16>
    %c7 = arith.constant 7 : index
    %c0_48 = arith.constant 0 : index
    %c0_49 = arith.constant 0 : index
    %56 = vector.load %arg2[%c7, %c0_48, %c0_49] : memref<16x3x8xbf16, #tpu.memory_space<vmem>>, vector<1x3x8xbf16>
    %57 = vector.shape_cast %56 : vector<1x3x8xbf16> to vector<3x8xbf16>
    %cst_50 = arith.constant dense<0.000000e+00> : vector<3x384xf32>
    %58 = tpu.matmul %57, %55, %cst_50 {dimension_numbers = #tpu.dot_dimension_numbers<[1], [0], [0], [1], [0, 0, 1, 1], [], []>} : vector<3x8xbf16>, vector<8x384xbf16>, vector<3x384xf32> -> vector<3x384xf32>
    %59 = arith.addf %45, %58 : vector<3x384xf32>
    %c13 = arith.constant 13 : index
    %c0_51 = arith.constant 0 : index
    %c0_52 = arith.constant 0 : index
    %60 = vector.load %arg2[%c13, %c0_51, %c0_52] : memref<16x3x8xbf16, #tpu.memory_space<vmem>>, vector<1x3x8xbf16>
    %61 = vector.shape_cast %60 : vector<1x3x8xbf16> to vector<3x8xbf16>
    %cst_53 = arith.constant dense<0.000000e+00> : vector<3x384xf32>
    %62 = tpu.matmul %61, %55, %cst_53 {dimension_numbers = #tpu.dot_dimension_numbers<[1], [0], [0], [1], [0, 0, 1, 1], [], []>} : vector<3x8xbf16>, vector<8x384xbf16>, vector<3x384xf32> -> vector<3x384xf32>
    %63 = arith.addf %53, %62 : vector<3x384xf32>
    %c0_54 = arith.constant 0 : index
    %c0_55 = arith.constant 0 : index
    %c36 = arith.constant 36 : index
    %64 = vector.load %arg1[%c0_54, %c0_55, %c36] : memref<1x8x512xbf16, #tpu.memory_space<vmem>>, vector<1x8x384xbf16>
    %65 = vector.shape_cast %64 : vector<1x8x384xbf16> to vector<8x384xbf16>
    %c10 = arith.constant 10 : index
    %c0_56 = arith.constant 0 : index
    %c0_57 = arith.constant 0 : index
    %66 = vector.load %arg2[%c10, %c0_56, %c0_57] : memref<16x3x8xbf16, #tpu.memory_space<vmem>>, vector<1x3x8xbf16>
    %67 = vector.shape_cast %66 : vector<1x3x8xbf16> to vector<3x8xbf16>
    %cst_58 = arith.constant dense<0.000000e+00> : vector<3x384xf32>
    %68 = tpu.matmul %67, %65, %cst_58 {dimension_numbers = #tpu.dot_dimension_numbers<[1], [0], [0], [1], [0, 0, 1, 1], [], []>} : vector<3x8xbf16>, vector<8x384xbf16>, vector<3x384xf32> -> vector<3x384xf32>
    %69 = arith.addf %49, %68 : vector<3x384xf32>
    %c0_59 = arith.constant 0 : index
    %c0_60 = arith.constant 0 : index
    %c37 = arith.constant 37 : index
    %70 = vector.load %arg1[%c0_59, %c0_60, %c37] : memref<1x8x512xbf16, #tpu.memory_space<vmem>>, vector<1x8x384xbf16>
    %71 = vector.shape_cast %70 : vector<1x8x384xbf16> to vector<8x384xbf16>
    %c11 = arith.constant 11 : index
    %c0_61 = arith.constant 0 : index
    %c0_62 = arith.constant 0 : index
    %72 = vector.load %arg2[%c11, %c0_61, %c0_62] : memref<16x3x8xbf16, #tpu.memory_space<vmem>>, vector<1x3x8xbf16>
    %73 = vector.shape_cast %72 : vector<1x3x8xbf16> to vector<3x8xbf16>
    %cst_63 = arith.constant dense<0.000000e+00> : vector<3x384xf32>
    %74 = tpu.matmul %73, %71, %cst_63 {dimension_numbers = #tpu.dot_dimension_numbers<[1], [0], [0], [1], [0, 0, 1, 1], [], []>} : vector<3x8xbf16>, vector<8x384xbf16>, vector<3x384xf32> -> vector<3x384xf32>
    %75 = arith.addf %69, %74 : vector<3x384xf32>
    %c14 = arith.constant 14 : index
    %c0_64 = arith.constant 0 : index
    %c0_65 = arith.constant 0 : index
    %76 = vector.load %arg2[%c14, %c0_64, %c0_65] : memref<16x3x8xbf16, #tpu.memory_space<vmem>>, vector<1x3x8xbf16>
    %77 = vector.shape_cast %76 : vector<1x3x8xbf16> to vector<3x8xbf16>
    %cst_66 = arith.constant dense<0.000000e+00> : vector<3x384xf32>
    %78 = tpu.matmul %77, %71, %cst_66 {dimension_numbers = #tpu.dot_dimension_numbers<[1], [0], [0], [1], [0, 0, 1, 1], [], []>} : vector<3x8xbf16>, vector<8x384xbf16>, vector<3x384xf32> -> vector<3x384xf32>
    %79 = arith.addf %63, %78 : vector<3x384xf32>
    %c0_67 = arith.constant 0 : index
    %c0_68 = arith.constant 0 : index
    %c38 = arith.constant 38 : index
    %80 = vector.load %arg1[%c0_67, %c0_68, %c38] : memref<1x8x512xbf16, #tpu.memory_space<vmem>>, vector<1x8x384xbf16>
    %81 = vector.shape_cast %80 : vector<1x8x384xbf16> to vector<8x384xbf16>
    %c15 = arith.constant 15 : index
    %c0_69 = arith.constant 0 : index
    %c0_70 = arith.constant 0 : index
    %82 = vector.load %arg2[%c15, %c0_69, %c0_70] : memref<16x3x8xbf16, #tpu.memory_space<vmem>>, vector<1x3x8xbf16>
    %83 = vector.shape_cast %82 : vector<1x3x8xbf16> to vector<3x8xbf16>
    %cst_71 = arith.constant dense<0.000000e+00> : vector<3x384xf32>
    %84 = tpu.matmul %83, %81, %cst_71 {dimension_numbers = #tpu.dot_dimension_numbers<[1], [0], [0], [1], [0, 0, 1, 1], [], []>} : vector<3x8xbf16>, vector<8x384xbf16>, vector<3x384xf32> -> vector<3x384xf32>
    %85 = arith.addf %79, %84 : vector<3x384xf32>
    %c0_72 = arith.constant 0 : index
    %c0_73 = arith.constant 0 : index
    %86 = vector.load %arg3[%c0_72, %c0_73] : memref<3x1xf32, #tpu.memory_space<vmem>>, vector<3x1xf32>
    %87 = vector.broadcast %86 : vector<3x1xf32> to vector<3x384xf32>
    %88 = arith.addf %41, %87 : vector<3x384xf32>
    %89 = math.tanh %88 : vector<3x384xf32>
    %c0_74 = arith.constant 0 : index
    %c0_75 = arith.constant 0 : index
    %c0_76 = arith.constant 0 : index
    %c0_77 = arith.constant 0 : index
    %90 = vector.load %arg4[%c0_74, %c0_75, %c0_76, %c0_77] : memref<1x4x3x384xf32, #tpu.memory_space<vmem>>, vector<1x1x3x384xf32>
    %91 = vector.shape_cast %90 : vector<1x1x3x384xf32> to vector<3x384xf32>
    %92 = vector.shape_cast %89 : vector<3x384xf32> to vector<1x1x3x384xf32>
    tpu.vector_store %arg4[%c0_74, %c0_75, %c0_76, %c0_77], %92 {strides = array<i32>} : memref<1x4x3x384xf32, #tpu.memory_space<vmem>>, vector<1x1x3x384xf32>,
    %93 = vector.broadcast %86 : vector<3x1xf32> to vector<3x384xf32>
    %94 = arith.addf %59, %93 : vector<3x384xf32>
    %95 = math.tanh %94 : vector<3x384xf32>
    %c0_78 = arith.constant 0 : index
    %c1_79 = arith.constant 1 : index
    %c0_80 = arith.constant 0 : index
    %c0_81 = arith.constant 0 : index
    %96 = vector.load %arg4[%c0_78, %c1_79, %c0_80, %c0_81] : memref<1x4x3x384xf32, #tpu.memory_space<vmem>>, vector<1x1x3x384xf32>
    %97 = vector.shape_cast %96 : vector<1x1x3x384xf32> to vector<3x384xf32>
    %98 = vector.shape_cast %95 : vector<3x384xf32> to vector<1x1x3x384xf32>
    tpu.vector_store %arg4[%c0_78, %c1_79, %c0_80, %c0_81], %98 {strides = array<i32>} : memref<1x4x3x384xf32, #tpu.memory_space<vmem>>, vector<1x1x3x384xf32>,
    %99 = vector.broadcast %86 : vector<3x1xf32> to vector<3x384xf32>
    %100 = arith.addf %75, %99 : vector<3x384xf32>
    %101 = math.tanh %100 : vector<3x384xf32>
    %c0_82 = arith.constant 0 : index
    %c2_83 = arith.constant 2 : index
    %c0_84 = arith.constant 0 : index
    %c0_85 = arith.constant 0 : index
    %102 = vector.load %arg4[%c0_82, %c2_83, %c0_84, %c0_85] : memref<1x4x3x384xf32, #tpu.memory_space<vmem>>, vector<1x1x3x384xf32>
    %103 = vector.shape_cast %102 : vector<1x1x3x384xf32> to vector<3x384xf32>
    %104 = vector.shape_cast %101 : vector<3x384xf32> to vector<1x1x3x384xf32>
    tpu.vector_store %arg4[%c0_82, %c2_83, %c0_84, %c0_85], %104 {strides = array<i32>} : memref<1x4x3x384xf32, #tpu.memory_space<vmem>>, vector<1x1x3x384xf32>,
    %105 = vector.broadcast %86 : vector<3x1xf32> to vector<3x384xf32>
    %106 = arith.addf %85, %105 : vector<3x384xf32>
    %107 = math.tanh %106 : vector<3x384xf32>
    %c0_86 = arith.constant 0 : index
    %c3_87 = arith.constant 3 : index
    %c0_88 = arith.constant 0 : index
    %c0_89 = arith.constant 0 : index
    %108 = vector.load %arg4[%c0_86, %c3_87, %c0_88, %c0_89] : memref<1x4x3x384xf32, #tpu.memory_space<vmem>>, vector<1x1x3x384xf32>
    %109 = vector.shape_cast %108 : vector<1x1x3x384xf32> to vector<3x384xf32>
    %110 = vector.shape_cast %107 : vector<3x384xf32> to vector<1x1x3x384xf32>
    tpu.vector_store %arg4[%c0_86, %c3_87, %c0_88, %c0_89], %110 {strides = array<i32>} : memref<1x4x3x384xf32, #tpu.memory_space<vmem>>, vector<1x1x3x384xf32>,
    return
  }
  func.func @transform_0(%arg0: i32) -> (i32, i32, i32) {
    %c0_i32 = arith.constant 0 : i32
    %c0_i32_0 = arith.constant 0 : i32
    %c0_i32_1 = arith.constant 0 : i32
    return %arg0, %c0_i32, %c0_i32_0 : i32, i32, i32
  }
  func.func @transform_1(%arg0: i32) -> (i32, i32, i32) {
    %c0_i32 = arith.constant 0 : i32
    %c0_i32_0 = arith.constant 0 : i32
    %c0_i32_1 = arith.constant 0 : i32
    %c0_i32_2 = arith.constant 0 : i32
    return %c0_i32, %c0_i32_0, %c0_i32_1 : i32, i32, i32
  }
  func.func @transform_2(%arg0: i32) -> (i32, i32) {
    %c0_i32 = arith.constant 0 : i32
    %c0_i32_0 = arith.constant 0 : i32
    %c0_i32_1 = arith.constant 0 : i32
    return %c0_i32, %c0_i32_0 : i32, i32
  }
  func.func @transform_3(%arg0: i32) -> (i32, i32, i32, i32) {
    %c0_i32 = arith.constant 0 : i32
    %c0_i32_0 = arith.constant 0 : i32
    %c0_i32_1 = arith.constant 0 : i32
    %c0_i32_2 = arith.constant 0 : i32
    return %arg0, %c0_i32, %c0_i32_0, %c0_i32_1 : i32, i32, i32, i32
  }
}

</mosaic_0001>

<llo_original>
// kernel: tpu_custom_call.1
$region0: #{tpu_custom_call.1}
  #allocation0 [shape = 'u32[]', space=smem, size = 0x4, offset = 0x4, fixed_abs, tag = 'smem constant byte address 0x4 - core index']
  #allocation1 [shape = 'u32[144,128]{1,0:T(1,128)}', space=vmem, size = 0x12000, scoped, tag = 'internal scratch']
  %s0 = inlined_call_operand.vmem [shape: bf16[2,8,512], index: 0, kind: input, shape index: {}]
  %s1 = inlined_call_operand.vmem [shape: bf16[16,3,8], index: 1, kind: input, shape index: {}]
  %s2 = inlined_call_operand.vmem [shape: f32[3,1], index: 2, kind: input, shape index: {}]
  %s3 = inlined_call_operand.vmem [shape: f32[2,4,3,384], index: 3, kind: output, shape index: {}]
  %s4 = sld [smem:[#allocation0]]
  $region45: #{tpu_custom_call.1} parent=0
    _
  %s6 = ssub.s32 1, %s4
  %s7 = scalar_select 0, %s6, %s4
  loop: start=0, step=1, limit=4
  $region2: #{tpu_custom_call.1} parent=0 // loop_pre_header
    _
  $region3: #{tpu_custom_call.1} parent=0 // loop_header
    %s9 = sphi 0, %s13
    %p10 = scmp.ge.s32.totalorder %s9, 4
    %s19 = sphi 0, %s21
    %s22 = sphi 0, %s19
    %s23 = sphi 0, %s22
    %s39 = sphi 0, %s23
    %s43 = sphi 0, %s43
    %s45 = sphi 0, %s43
    %s46 = sphi 0, %s45
    %s60 = sphi 0, %s46
    %s64 = sphi 0, %s64
    %s66 = sphi 0, %s64
    %s67 = sphi 0, %s66
    %s81 = sphi 0, %s67
    %s87 = sphi 0, %s89
    %s90 = sphi 0, %s87
    %s91 = sphi 0, %s90
    %s107 = sphi 0, %s91
  $region4: #{tpu_custom_call.1} parent=0 // loop_header_branch
    %12 = sbr.rel (%p10) target = $region8
  $region5: #{tpu_custom_call.1} parent=0 // loop_body
    %s14 = ssub.s32 %s9, 1
    %s15 = ssub.s32 %s9, 2
    %s16 = sadd.s32 %s9, 1
    %s17 = ssub.s32 %s9, %s16
    %p18 = scmp.eq.s32.totalorder %s17, 0
    %s20 = sadd.s32 %s19, 1
    %s21 = scalar_select %p18, %s19, %s20
    %p24 = pneg %p18
    %p25 = scmp.eq.s32.totalorder %s9, 1
    %p26 = por %p24, %p25
    %p27 = scmp.ne.s32.totalorder %s19, %s22
    %p28 = scmp.eq.s32.totalorder %s9, 0
    %p29 = por %p27, %p28
    %p30 = scmp.ne.s32.totalorder %s19, %s22
    %p31 = scmp.eq.s32.totalorder %s14, 1
    %p32 = por %p30, %p31
    %p33 = scmp.ne.s32.totalorder %s22, %s23
    %p34 = scmp.eq.s32.totalorder %s14, 0
    %p35 = por %p33, %p34
    %p36 = scmp.ne.s32.totalorder %s22, %s23
    %p37 = scmp.eq.s32.totalorder %s15, 1
    %p38 = por %p36, %p37
    %p40 = scmp.ne.s32.totalorder %s23, %s39
    %p41 = scmp.eq.s32.totalorder %s15, 0
    %p42 = por %p40, %p41
    %s44 = sadd.s32 %s43, 1
    %p47 = scmp.eq.s32.totalorder %s9, 1
    %p48 = scmp.ne.s32.totalorder %s43, %s45
    %p49 = scmp.eq.s32.totalorder %s9, 0
    %p50 = por %p48, %p49
    %p51 = scmp.ne.s32.totalorder %s43, %s45
    %p52 = scmp.eq.s32.totalorder %s14, 1
    %p53 = por %p51, %p52
    %p54 = scmp.ne.s32.totalorder %s45, %s46
    %p55 = scmp.eq.s32.totalorder %s14, 0
    %p56 = por %p54, %p55
    %p57 = scmp.ne.s32.totalorder %s45, %s46
    %p58 = scmp.eq.s32.totalorder %s15, 1
    %p59 = por %p57, %p58
    %p61 = scmp.ne.s32.totalorder %s46, %s60
    %p62 = scmp.eq.s32.totalorder %s15, 0
    %p63 = por %p61, %p62
    %s65 = sadd.s32 %s64, 1
    %p68 = scmp.eq.s32.totalorder %s9, 1
    %p69 = scmp.ne.s32.totalorder %s64, %s66
    %p70 = scmp.eq.s32.totalorder %s9, 0
    %p71 = por %p69, %p70
    %p72 = scmp.ne.s32.totalorder %s64, %s66
    %p73 = scmp.eq.s32.totalorder %s14, 1
    %p74 = por %p72, %p73
    %p75 = scmp.ne.s32.totalorder %s66, %s67
    %p76 = scmp.eq.s32.totalorder %s14, 0
    %p77 = por %p75, %p76
    %p78 = scmp.ne.s32.totalorder %s66, %s67
    %p79 = scmp.eq.s32.totalorder %s15, 1
    %p80 = por %p78, %p79
    %p82 = scmp.ne.s32.totalorder %s67, %s81
    %p83 = scmp.eq.s32.totalorder %s15, 0
    %p84 = por %p82, %p83
    %s85 = ssub.s32 %s9, %s16
    %p86 = scmp.eq.s32.totalorder %s85, 0
    %s88 = sadd.s32 %s87, 1
    %s89 = scalar_select %p86, %s87, %s88
    %p92 = pneg %p86
    %p93 = scmp.eq.s32.totalorder %s9, 1
    %p94 = por %p92, %p93
    %p95 = scmp.ne.s32.totalorder %s87, %s90
    %p96 = scmp.eq.s32.totalorder %s9, 0
    %p97 = por %p95, %p96
    %p98 = scmp.ne.s32.totalorder %s87, %s90
    %p99 = scmp.eq.s32.totalorder %s14, 1
    %p100 = por %p98, %p99
    %p101 = scmp.ne.s32.totalorder %s90, %s91
    %p102 = scmp.eq.s32.totalorder %s14, 0
    %p103 = por %p101, %p102
    %p104 = scmp.ne.s32.totalorder %s90, %s91
    %p105 = scmp.eq.s32.totalorder %s15, 1
    %p106 = por %p104, %p105
    %p108 = scmp.ne.s32.totalorder %s91, %s107
    %p109 = scmp.eq.s32.totalorder %s15, 0
    %p110 = por %p108, %p109
    %p111 = scmp.le.s32.totalorder 1, %s9
    %p112 = scmp.lt.s32.totalorder %s9, 3
    %p113 = pnand %p111, %p112
    %p114 = pneg %p113
    // Predicated region
    $region9: #{tpu_custom_call.1} parent=5 // pred_check
      _
    $region10: #{tpu_custom_call.1} parent=5 // pred_check_branch
      %116 = sbr.rel (%p113) target = $region12
    $region11: #{tpu_custom_call.1} parent=5 // pred_region
      %s117 = ssub.s32 %s9, 1
      // Predicated region
      $region13: #{tpu_custom_call.1} parent=11 // pred_check
        %p118 = pneg %p56
      $region14: #{tpu_custom_call.1} parent=11 // pred_check_branch
        %120 = sbr.rel (%p118) target = $region16
      $region15: #{tpu_custom_call.1} parent=11 // pred_region
        _
      $region16: #{tpu_custom_call.1} parent=11 // pred_fallthru
        _
      // Predicated region
      $region17: #{tpu_custom_call.1} parent=11 // pred_check
        %p121 = pneg %p77
      $region18: #{tpu_custom_call.1} parent=11 // pred_check_branch
        %123 = sbr.rel (%p121) target = $region20
      $region19: #{tpu_custom_call.1} parent=11 // pred_region
        _
      $region20: #{tpu_custom_call.1} parent=11 // pred_fallthru
        _
    $region12: #{tpu_custom_call.1} parent=5 // pred_fallthru
      _
    %p124 = scmp.lt.s32.totalorder %s9, 2
    // Predicated region
    $region21: #{tpu_custom_call.1} parent=5 // pred_check
      %p125 = pneg %p124
    $region22: #{tpu_custom_call.1} parent=5 // pred_check_branch
      %127 = sbr.rel (%p125) target = $region24
    $region23: #{tpu_custom_call.1} parent=5 // pred_region
      // Predicated region
      $region25: #{tpu_custom_call.1} parent=23 // pred_check
        %p128 = pneg %p29
      $region26: #{tpu_custom_call.1} parent=23 // pred_check_branch
        %130 = sbr.rel (%p128) target = $region28
      $region27: #{tpu_custom_call.1} parent=23 // pred_region
        %p131 = scmp.lt.s32.totalorder %s9, 1
        %s132 = scalar_select %p131, %s9, 1
        %s133 = smul.addr %s132, 4
        %s134 = smul.addr %s133, 4
        %s135 = scalar_lea.vmem %s0, %s134
      $region28: #{tpu_custom_call.1} parent=23 // pred_fallthru
        _
    $region24: #{tpu_custom_call.1} parent=5 // pred_fallthru
      _
    %p136 = scmp.le.s32.totalorder 1, %s9
    %p137 = scmp.lt.s32.totalorder %s9, 3
    %p138 = pnand %p136, %p137
    %p139 = pneg %p138
    // Predicated region
    $region29: #{tpu_custom_call.1} parent=5 // pred_check
      _
    $region30: #{tpu_custom_call.1} parent=5 // pred_check_branch
      %141 = sbr.rel (%p138) target = $region32
    $region31: #{tpu_custom_call.1} parent=5 // pred_region
      %s142 = ssub.s32 %s9, 1
      %p143 = scmp.lt.s32.totalorder %s14, 1
      %s144 = scalar_select %p143, %s14, 1
      %s145 = smul.addr %s144, 4
      %s146 = smul.addr %s145, 4
      %s147 = scalar_lea.vmem %s0, %s146
      %p148 = pneg %p35
      %p149 = pneg %p32
      %p150 = pneg %p56
      %p151 = pneg %p53
      %p152 = pneg %p77
      %p153 = pneg %p74
      %p154 = pneg %p103
      %p155 = pneg %p100
      %p156 = scmp.lt.s32.totalorder %s14, 1
      %s157 = scalar_select %p156, %s14, 1
      %s158 = smul.addr %s157, 12
      %s159 = smul.addr %s158, 4
      %s160 = scalar_lea.vmem %s3, %s159
      %p161 = scmp.lt.s32.totalorder %s14, 1
      %s162 = scalar_select %p161, %s14, 1
      %s163 = smul.addr %s162, 4
      %s164 = smul.addr %s163, 4
      %s165 = scalar_lea.vmem %s0, %s164
      %p166 = scmp.lt.s32.totalorder %s14, 1
      %s167 = scalar_select %p166, %s14, 1
      %s168 = smul.addr %s167, 12
      %s169 = smul.addr %s168, 4
      %s170 = scalar_lea.vmem %s3, %s169
      %v172 = vld [vmem:[%s165] sm:$0xff]
      %v173 = vld [vmem:[%s165 + $0x8] sm:$0xf]
      %v174 = vld [vmem:[%s1] sm:$0x3]
      %v175 = vld [vmem:[%s165] sm:$0xff]
      %v176 = vld [vmem:[%s165 + $0x8] sm:$0xff]
      %s177 = scalar_lea.vmem %s1, 2
      %v178 = vld [vmem:[%s177] sm:$0x3]
      %v181 = vunpack.c.l.b16 %v175
      %v182 = vunpack.c.h.b16 %v175
      %v183 = vunpack.c.l.b16 %v176
      %v184 = vunpack.c.h.b16 %v176
      %v185 = vpack.c.b16 %v181, %v181
      %v186 = vpack.c.b16 %v182, %v182
      %v187 = vpack.c.b16 %v183, %v183
      %v188 = vpack.c.b16 %v184, %v184
      %189 = vrot.lane.b32.xlu0 %v185, 127
      %v190 = vpop.permute.xlu0 %189
      %191 = vrot.lane.b32.xlu0 %v186, 127
      %v192 = vpop.permute.xlu0 %191
      %193 = vrot.lane.b32.xlu0 %v187, 127
      %v194 = vpop.permute.xlu0 %193
      %195 = vrot.lane.b32.xlu0 %v188, 127
      %v196 = vpop.permute.xlu0 %195
      %vm197 = vcmask 1039360
      %v198 = vsel %vm197, %v190, %v192
      %v199 = vsel %vm197, %v192, %v194
      %v200 = vsel %vm197, %v194, %v196
      %vm201 = vcmask 64512
      %v203 = vsel %vm201, %v178, 0
      %vm205 = vcmask 1043456
      %v207 = vsel %vm205, %v198, 0
      %v210 = vsel %vm205, %v199, 0
      %v213 = vsel %vm205, %v200, 0
      %215 = vmatprep.subr.bf16.mxu0 %v210
      %216 = vmatpush1.bf16.msra.mxu0 %v207
      %217 = vmatprep.subr.bf16.mxu0 0
      %218 = vmatpush1.bf16.msra.mxu0 0
      %219 = vmatprep.subr.bf16.mxu0 0
      %220 = vmatpush1.bf16.msra.mxu0 0
      %221 = vmatprep.subr.bf16.mxu0 0
      %222 = vmatpush1.bf16.msra.mxu0 0
      %223 = vmatprep.subr.bf16.mxu0 0
      %224 = vmatpush1.bf16.msra.mxu0 0
      %225 = vmatprep.subr.bf16.mxu0 0
      %226 = vmatpush1.bf16.msra.mxu0 0
      %227 = vmatprep.subr.bf16.mxu0 0
      %228 = vmatpush1.bf16.msra.mxu0 0
      %229 = vmatprep.subr.bf16.mxu0 0
      %230 = vmatpush1.bf16.msra.mxu0 0
      %231 = vmatprep.subr.bf16.mxu0 0
      %232 = vmatpush1.bf16.msra.mxu0 0
      %233 = vmatprep.subr.bf16.mxu0 0
      %234 = vmatpush1.bf16.msra.mxu0 0
      %235 = vmatprep.subr.bf16.mxu0 0
      %236 = vmatpush1.bf16.msra.mxu0 0
      %237 = vmatprep.subr.bf16.mxu0 0
      %238 = vmatpush1.bf16.msra.mxu0 0
      %239 = vmatprep.subr.bf16.mxu0 0
      %240 = vmatpush1.bf16.msra.mxu0 0
      %241 = vmatprep.subr.bf16.mxu0 0
      %242 = vmatpush1.bf16.msra.mxu0 0
      %243 = vmatprep.subr.bf16.mxu0 0
      %244 = vmatpush1.bf16.msra.mxu0 0
      %245 = vmatprep.subr.bf16.mxu0 0
      %246 = vmatpush1.bf16.msra.mxu0 0
      %247 = vmatprep.mubr.bf16.mxu0 0
      %248 = vmatmul.mubr.bf16.gmra.mrb[0].mxu0 %v203
      %v249 = vpop.f32.mrb[0].mxu0
      %v250 = vadd.f32 0.0, %v249
      %v251 = vpop.f32.mrb[0].mxu0
      %v252 = vadd.f32 0.0, %v251
      %v253 = vpop.f32.mrb[0].mxu0
      %v254 = vpop.f32.mrb[0].mxu0
      %255 = vdwg.mxu0
      %256 = vmatprep.subr.bf16.mxu0 0
      %257 = vmatpush1.bf16.msra.mxu0 %v213
      %258 = vmatprep.subr.bf16.mxu0 0
      %259 = vmatpush1.bf16.msra.mxu0 0
      %260 = vmatprep.subr.bf16.mxu0 0
      %261 = vmatpush1.bf16.msra.mxu0 0
      %262 = vmatprep.subr.bf16.mxu0 0
      %263 = vmatpush1.bf16.msra.mxu0 0
      %264 = vmatprep.subr.bf16.mxu0 0
      %265 = vmatpush1.bf16.msra.mxu0 0
      %266 = vmatprep.subr.bf16.mxu0 0
      %267 = vmatpush1.bf16.msra.mxu0 0
      %268 = vmatprep.subr.bf16.mxu0 0
      %269 = vmatpush1.bf16.msra.mxu0 0
      %270 = vmatprep.subr.bf16.mxu0 0
      %271 = vmatpush1.bf16.msra.mxu0 0
      %272 = vmatprep.subr.bf16.mxu0 0
      %273 = vmatpush1.bf16.msra.mxu0 0
      %274 = vmatprep.subr.bf16.mxu0 0
      %275 = vmatpush1.bf16.msra.mxu0 0
      %276 = vmatprep.subr.bf16.mxu0 0
      %277 = vmatpush1.bf16.msra.mxu0 0
      %278 = vmatprep.subr.bf16.mxu0 0
      %279 = vmatpush1.bf16.msra.mxu0 0
      %280 = vmatprep.subr.bf16.mxu0 0
      %281 = vmatpush1.bf16.msra.mxu0 0
      %282 = vmatprep.subr.bf16.mxu0 0
      %283 = vmatpush1.bf16.msra.mxu0 0
      %284 = vmatprep.subr.bf16.mxu0 0
      %285 = vmatpush1.bf16.msra.mxu0 0
      %286 = vmatprep.subr.bf16.mxu0 0
      %287 = vmatpush1.bf16.msra.mxu0 0
      %288 = vmatprep.mubr.bf16.mxu0 0
      %289 = vmatmul.mubr.bf16.gmra.mrb[0].mxu0 %v203
      %v290 = vpop.f32.mrb[0].mxu0
      %v291 = vadd.f32 0.0, %v290
      %v292 = vpop.f32.mrb[0].mxu0
      %v293 = vpop.f32.mrb[0].mxu0
      %v294 = vpop.f32.mrb[0].mxu0
      %295 = vdwg.mxu0
      %v298 = vunpack.c.l.b16 %v172
      %v299 = vunpack.c.h.b16 %v172
      %v300 = vunpack.c.l.b16 %v173
      %v301 = vpack.c.b16 %v298, %v298
      %v302 = vpack.c.b16 %v299, %v299
      %v303 = vpack.c.b16 %v300, %v300
      %v305 = vsel %vm201, %v174, 0
      %v308 = vsel %vm205, %v301, 0
      %v311 = vsel %vm205, %v302, 0
      %v314 = vsel %vm205, %v303, 0
      %316 = vmatprep.subr.bf16.mxu0 %v311
      %317 = vmatpush1.bf16.msra.mxu0 %v308
      %318 = vmatprep.subr.bf16.mxu0 0
      %319 = vmatpush1.bf16.msra.mxu0 0
      %320 = vmatprep.subr.bf16.mxu0 0
      %321 = vmatpush1.bf16.msra.mxu0 0
      %322 = vmatprep.subr.bf16.mxu0 0
      %323 = vmatpush1.bf16.msra.mxu0 0
      %324 = vmatprep.subr.bf16.mxu0 0
      %325 = vmatpush1.bf16.msra.mxu0 0
      %326 = vmatprep.subr.bf16.mxu0 0
      %327 = vmatpush1.bf16.msra.mxu0 0
      %328 = vmatprep.subr.bf16.mxu0 0
      %329 = vmatpush1.bf16.msra.mxu0 0
      %330 = vmatprep.subr.bf16.mxu0 0
      %331 = vmatpush1.bf16.msra.mxu0 0
      %332 = vmatprep.subr.bf16.mxu0 0
      %333 = vmatpush1.bf16.msra.mxu0 0
      %334 = vmatprep.subr.bf16.mxu0 0
      %335 = vmatpush1.bf16.msra.mxu0 0
      %336 = vmatprep.subr.bf16.mxu0 0
      %337 = vmatpush1.bf16.msra.mxu0 0
      %338 = vmatprep.subr.bf16.mxu0 0
      %339 = vmatpush1.bf16.msra.mxu0 0
      %340 = vmatprep.subr.bf16.mxu0 0
      %341 = vmatpush1.bf16.msra.mxu0 0
      %342 = vmatprep.subr.bf16.mxu0 0
      %343 = vmatpush1.bf16.msra.mxu0 0
      %344 = vmatprep.subr.bf16.mxu0 0
      %345 = vmatpush1.bf16.msra.mxu0 0
      %346 = vmatprep.subr.bf16.mxu0 0
      %347 = vmatpush1.bf16.msra.mxu0 0
      %348 = vmatprep.mubr.bf16.mxu0 0
      %349 = vmatmul.mubr.bf16.gmra.mrb[0].mxu0 %v305
      %v350 = vpop.f32.mrb[0].mxu0
      %v351 = vadd.f32 %v250, %v350
      %v352 = vpop.f32.mrb[0].mxu0
      %v353 = vadd.f32 %v252, %v352
      %v354 = vpop.f32.mrb[0].mxu0
      %v355 = vpop.f32.mrb[0].mxu0
      %356 = vdwg.mxu0
      %357 = vmatprep.subr.bf16.mxu0 0
      %358 = vmatpush1.bf16.msra.mxu0 %v314
      %359 = vmatprep.subr.bf16.mxu0 0
      %360 = vmatpush1.bf16.msra.mxu0 0
      %361 = vmatprep.subr.bf16.mxu0 0
      %362 = vmatpush1.bf16.msra.mxu0 0
      %363 = vmatprep.subr.bf16.mxu0 0
      %364 = vmatpush1.bf16.msra.mxu0 0
      %365 = vmatprep.subr.bf16.mxu0 0
      %366 = vmatpush1.bf16.msra.mxu0 0
      %367 = vmatprep.subr.bf16.mxu0 0
      %368 = vmatpush1.bf16.msra.mxu0 0
      %369 = vmatprep.subr.bf16.mxu0 0
      %370 = vmatpush1.bf16.msra.mxu0 0
      %371 = vmatprep.subr.bf16.mxu0 0
      %372 = vmatpush1.bf16.msra.mxu0 0
      %373 = vmatprep.subr.bf16.mxu0 0
      %374 = vmatpush1.bf16.msra.mxu0 0
      %375 = vmatprep.subr.bf16.mxu0 0
      %376 = vmatpush1.bf16.msra.mxu0 0
      %377 = vmatprep.subr.bf16.mxu0 0
      %378 = vmatpush1.bf16.msra.mxu0 0
      %379 = vmatprep.subr.bf16.mxu0 0
      %380 = vmatpush1.bf16.msra.mxu0 0
      %381 = vmatprep.subr.bf16.mxu0 0
      %382 = vmatpush1.bf16.msra.mxu0 0
      %383 = vmatprep.subr.bf16.mxu0 0
      %384 = vmatpush1.bf16.msra.mxu0 0
      %385 = vmatprep.subr.bf16.mxu0 0
      %386 = vmatpush1.bf16.msra.mxu0 0
      %387 = vmatprep.subr.bf16.mxu0 0
      %388 = vmatpush1.bf16.msra.mxu0 0
      %389 = vmatprep.mubr.bf16.mxu0 0
      %390 = vmatmul.mubr.bf16.gmra.mrb[0].mxu0 %v305
      %v391 = vpop.f32.mrb[0].mxu0
      %v392 = vadd.f32 %v291, %v391
      %v393 = vpop.f32.mrb[0].mxu0
      %v394 = vpop.f32.mrb[0].mxu0
      %v395 = vpop.f32.mrb[0].mxu0
      %396 = vdwg.mxu0
      %s397 = scalar_lea.vmem %s1, 8
      %v398 = vld [vmem:[%s397] sm:$0x3]
      %s399 = scalar_lea.vmem %s1, 10
      %v400 = vld [vmem:[%s399] sm:$0x3]
      %401 = vrot.lane.b32.xlu0 %v185, 126
      %v402 = vpop.permute.xlu0 %401
      %403 = vrot.lane.b32.xlu0 %v186, 126
      %v404 = vpop.permute.xlu0 %403
      %405 = vrot.lane.b32.xlu0 %v187, 126
      %v406 = vpop.permute.xlu0 %405
      %407 = vrot.lane.b32.xlu0 %v188, 126
      %v408 = vpop.permute.xlu0 %407
      %vm409 = vcmask 1031168
      %v410 = vsel %vm409, %v402, %v404
      %v411 = vsel %vm409, %v404, %v406
      %v412 = vsel %vm409, %v406, %v408
      %v414 = vsel %vm201, %v400, 0
      %v417 = vsel %vm205, %v410, 0
      %v420 = vsel %vm205, %v411, 0
      %v423 = vsel %vm205, %v412, 0
      %425 = vmatprep.subr.bf16.mxu0 %v420
      %426 = vmatpush1.bf16.msra.mxu0 %v417
      %427 = vmatprep.subr.bf16.mxu0 0
      %428 = vmatpush1.bf16.msra.mxu0 0
      %429 = vmatprep.subr.bf16.mxu0 0
      %430 = vmatpush1.bf16.msra.mxu0 0
      %431 = vmatprep.subr.bf16.mxu0 0
      %432 = vmatpush1.bf16.msra.mxu0 0
      %433 = vmatprep.subr.bf16.mxu0 0
      %434 = vmatpush1.bf16.msra.mxu0 0
      %435 = vmatprep.subr.bf16.mxu0 0
      %436 = vmatpush1.bf16.msra.mxu0 0
      %437 = vmatprep.subr.bf16.mxu0 0
      %438 = vmatpush1.bf16.msra.mxu0 0
      %439 = vmatprep.subr.bf16.mxu0 0
      %440 = vmatpush1.bf16.msra.mxu0 0
      %441 = vmatprep.subr.bf16.mxu0 0
      %442 = vmatpush1.bf16.msra.mxu0 0
      %443 = vmatprep.subr.bf16.mxu0 0
      %444 = vmatpush1.bf16.msra.mxu0 0
      %445 = vmatprep.subr.bf16.mxu0 0
      %446 = vmatpush1.bf16.msra.mxu0 0
      %447 = vmatprep.subr.bf16.mxu0 0
      %448 = vmatpush1.bf16.msra.mxu0 0
      %449 = vmatprep.subr.bf16.mxu0 0
      %450 = vmatpush1.bf16.msra.mxu0 0
      %451 = vmatprep.subr.bf16.mxu0 0
      %452 = vmatpush1.bf16.msra.mxu0 0
      %453 = vmatprep.subr.bf16.mxu0 0
      %454 = vmatpush1.bf16.msra.mxu0 0
      %455 = vmatprep.subr.bf16.mxu0 0
      %456 = vmatpush1.bf16.msra.mxu0 0
      %457 = vmatprep.mubr.bf16.mxu0 0
      %458 = vmatmul.mubr.bf16.gmra.mrb[0].mxu0 %v414
      %v459 = vpop.f32.mrb[0].mxu0
      %v460 = vadd.f32 0.0, %v459
      %v461 = vpop.f32.mrb[0].mxu0
      %v462 = vadd.f32 0.0, %v461
      %v463 = vpop.f32.mrb[0].mxu0
      %v464 = vpop.f32.mrb[0].mxu0
      %465 = vdwg.mxu0
      %466 = vmatprep.subr.bf16.mxu0 0
      %467 = vmatpush1.bf16.msra.mxu0 %v423
      %468 = vmatprep.subr.bf16.mxu0 0
      %469 = vmatpush1.bf16.msra.mxu0 0
      %470 = vmatprep.subr.bf16.mxu0 0
      %471 = vmatpush1.bf16.msra.mxu0 0
      %472 = vmatprep.subr.bf16.mxu0 0
      %473 = vmatpush1.bf16.msra.mxu0 0
      %474 = vmatprep.subr.bf16.mxu0 0
      %475 = vmatpush1.bf16.msra.mxu0 0
      %476 = vmatprep.subr.bf16.mxu0 0
      %477 = vmatpush1.bf16.msra.mxu0 0
      %478 = vmatprep.subr.bf16.mxu0 0
      %479 = vmatpush1.bf16.msra.mxu0 0
      %480 = vmatprep.subr.bf16.mxu0 0
      %481 = vmatpush1.bf16.msra.mxu0 0
      %482 = vmatprep.subr.bf16.mxu0 0
      %483 = vmatpush1.bf16.msra.mxu0 0
      %484 = vmatprep.subr.bf16.mxu0 0
      %485 = vmatpush1.bf16.msra.mxu0 0
      %486 = vmatprep.subr.bf16.mxu0 0
      %487 = vmatpush1.bf16.msra.mxu0 0
      %488 = vmatprep.subr.bf16.mxu0 0
      %489 = vmatpush1.bf16.msra.mxu0 0
      %490 = vmatprep.subr.bf16.mxu0 0
      %491 = vmatpush1.bf16.msra.mxu0 0
      %492 = vmatprep.subr.bf16.mxu0 0
      %493 = vmatpush1.bf16.msra.mxu0 0
      %494 = vmatprep.subr.bf16.mxu0 0
      %495 = vmatpush1.bf16.msra.mxu0 0
      %496 = vmatprep.subr.bf16.mxu0 0
      %497 = vmatpush1.bf16.msra.mxu0 0
      %498 = vmatprep.mubr.bf16.mxu0 0
      %499 = vmatmul.mubr.bf16.gmra.mrb[0].mxu0 %v414
      %v500 = vpop.f32.mrb[0].mxu0
      %v501 = vadd.f32 0.0, %v500
      %v502 = vpop.f32.mrb[0].mxu0
      %v503 = vpop.f32.mrb[0].mxu0
      %v504 = vpop.f32.mrb[0].mxu0
      %505 = vdwg.mxu0
      %v507 = vsel %vm201, %v398, 0
      %509 = vmatprep.subr.bf16.mxu0 %v210
      %510 = vmatpush1.bf16.msra.mxu0 %v207
      %511 = vmatprep.subr.bf16.mxu0 0
      %512 = vmatpush1.bf16.msra.mxu0 0
      %513 = vmatprep.subr.bf16.mxu0 0
      %514 = vmatpush1.bf16.msra.mxu0 0
      %515 = vmatprep.subr.bf16.mxu0 0
      %516 = vmatpush1.bf16.msra.mxu0 0
      %517 = vmatprep.subr.bf16.mxu0 0
      %518 = vmatpush1.bf16.msra.mxu0 0
      %519 = vmatprep.subr.bf16.mxu0 0
      %520 = vmatpush1.bf16.msra.mxu0 0
      %521 = vmatprep.subr.bf16.mxu0 0
      %522 = vmatpush1.bf16.msra.mxu0 0
      %523 = vmatprep.subr.bf16.mxu0 0
      %524 = vmatpush1.bf16.msra.mxu0 0
      %525 = vmatprep.subr.bf16.mxu0 0
      %526 = vmatpush1.bf16.msra.mxu0 0
      %527 = vmatprep.subr.bf16.mxu0 0
      %528 = vmatpush1.bf16.msra.mxu0 0
      %529 = vmatprep.subr.bf16.mxu0 0
      %530 = vmatpush1.bf16.msra.mxu0 0
      %531 = vmatprep.subr.bf16.mxu0 0
      %532 = vmatpush1.bf16.msra.mxu0 0
      %533 = vmatprep.subr.bf16.mxu0 0
      %534 = vmatpush1.bf16.msra.mxu0 0
      %535 = vmatprep.subr.bf16.mxu0 0
      %536 = vmatpush1.bf16.msra.mxu0 0
      %537 = vmatprep.subr.bf16.mxu0 0
      %538 = vmatpush1.bf16.msra.mxu0 0
      %539 = vmatprep.subr.bf16.mxu0 0
      %540 = vmatpush1.bf16.msra.mxu0 0
      %541 = vmatprep.mubr.bf16.mxu0 0
      %542 = vmatmul.mubr.bf16.gmra.mrb[0].mxu0 %v507
      %v543 = vpop.f32.mrb[0].mxu0
      %v544 = vadd.f32 %v460, %v543
      %v545 = vpop.f32.mrb[0].mxu0
      %v546 = vadd.f32 %v462, %v545
      %v547 = vpop.f32.mrb[0].mxu0
      %v548 = vpop.f32.mrb[0].mxu0
      %549 = vdwg.mxu0
      %550 = vmatprep.subr.bf16.mxu0 0
      %551 = vmatpush1.bf16.msra.mxu0 %v213
      %552 = vmatprep.subr.bf16.mxu0 0
      %553 = vmatpush1.bf16.msra.mxu0 0
      %554 = vmatprep.subr.bf16.mxu0 0
      %555 = vmatpush1.bf16.msra.mxu0 0
      %556 = vmatprep.subr.bf16.mxu0 0
      %557 = vmatpush1.bf16.msra.mxu0 0
      %558 = vmatprep.subr.bf16.mxu0 0
      %559 = vmatpush1.bf16.msra.mxu0 0
      %560 = vmatprep.subr.bf16.mxu0 0
      %561 = vmatpush1.bf16.msra.mxu0 0
      %562 = vmatprep.subr.bf16.mxu0 0
      %563 = vmatpush1.bf16.msra.mxu0 0
      %564 = vmatprep.subr.bf16.mxu0 0
      %565 = vmatpush1.bf16.msra.mxu0 0
      %566 = vmatprep.subr.bf16.mxu0 0
      %567 = vmatpush1.bf16.msra.mxu0 0
      %568 = vmatprep.subr.bf16.mxu0 0
      %569 = vmatpush1.bf16.msra.mxu0 0
      %570 = vmatprep.subr.bf16.mxu0 0
      %571 = vmatpush1.bf16.msra.mxu0 0
      %572 = vmatprep.subr.bf16.mxu0 0
      %573 = vmatpush1.bf16.msra.mxu0 0
      %574 = vmatprep.subr.bf16.mxu0 0
      %575 = vmatpush1.bf16.msra.mxu0 0
      %576 = vmatprep.subr.bf16.mxu0 0
      %577 = vmatpush1.bf16.msra.mxu0 0
      %578 = vmatprep.subr.bf16.mxu0 0
      %579 = vmatpush1.bf16.msra.mxu0 0
      %580 = vmatprep.subr.bf16.mxu0 0
      %581 = vmatpush1.bf16.msra.mxu0 0
      %582 = vmatprep.mubr.bf16.mxu0 0
      %583 = vmatmul.mubr.bf16.gmra.mrb[0].mxu0 %v507
      %v584 = vpop.f32.mrb[0].mxu0
      %v585 = vadd.f32 %v501, %v584
      %v586 = vpop.f32.mrb[0].mxu0
      %v587 = vpop.f32.mrb[0].mxu0
      %v588 = vpop.f32.mrb[0].mxu0
      %589 = vdwg.mxu0
      %s590 = scalar_lea.vmem %s1, 4
      %v591 = vld [vmem:[%s590] sm:$0x3]
      %592 = vrot.lane.b32.xlu0 %v185, 110
      %v593 = vpop.permute.xlu0 %592
      %594 = vrot.lane.b32.xlu0 %v186, 110
      %v595 = vpop.permute.xlu0 %594
      %596 = vrot.lane.b32.xlu0 %v187, 110
      %v597 = vpop.permute.xlu0 %596
      %598 = vrot.lane.b32.xlu0 %v188, 110
      %v599 = vpop.permute.xlu0 %598
      %vm600 = vcmask 900096
      %v601 = vsel %vm600, %v593, %v595
      %v602 = vsel %vm600, %v595, %v597
      %v603 = vsel %vm600, %v597, %v599
      %v605 = vsel %vm201, %v591, 0
      %v608 = vsel %vm205, %v601, 0
      %v611 = vsel %vm205, %v602, 0
      %v614 = vsel %vm205, %v603, 0
      %616 = vmatprep.subr.bf16.mxu0 %v611
      %617 = vmatpush1.bf16.msra.mxu0 %v608
      %618 = vmatprep.subr.bf16.mxu0 0
      %619 = vmatpush1.bf16.msra.mxu0 0
      %620 = vmatprep.subr.bf16.mxu0 0
      %621 = vmatpush1.bf16.msra.mxu0 0
      %622 = vmatprep.subr.bf16.mxu0 0
      %623 = vmatpush1.bf16.msra.mxu0 0
      %624 = vmatprep.subr.bf16.mxu0 0
      %625 = vmatpush1.bf16.msra.mxu0 0
      %626 = vmatprep.subr.bf16.mxu0 0
      %627 = vmatpush1.bf16.msra.mxu0 0
      %628 = vmatprep.subr.bf16.mxu0 0
      %629 = vmatpush1.bf16.msra.mxu0 0
      %630 = vmatprep.subr.bf16.mxu0 0
      %631 = vmatpush1.bf16.msra.mxu0 0
      %632 = vmatprep.subr.bf16.mxu0 0
      %633 = vmatpush1.bf16.msra.mxu0 0
      %634 = vmatprep.subr.bf16.mxu0 0
      %635 = vmatpush1.bf16.msra.mxu0 0
      %636 = vmatprep.subr.bf16.mxu0 0
      %637 = vmatpush1.bf16.msra.mxu0 0
      %638 = vmatprep.subr.bf16.mxu0 0
      %639 = vmatpush1.bf16.msra.mxu0 0
      %640 = vmatprep.subr.bf16.mxu0 0
      %641 = vmatpush1.bf16.msra.mxu0 0
      %642 = vmatprep.subr.bf16.mxu0 0
      %643 = vmatpush1.bf16.msra.mxu0 0
      %644 = vmatprep.subr.bf16.mxu0 0
      %645 = vmatpush1.bf16.msra.mxu0 0
      %646 = vmatprep.subr.bf16.mxu0 0
      %647 = vmatpush1.bf16.msra.mxu0 0
      %648 = vmatprep.mubr.bf16.mxu0 0
      %649 = vmatmul.mubr.bf16.gmra.mrb[0].mxu0 %v605
      %v650 = vpop.f32.mrb[0].mxu0
      %v651 = vadd.f32 0.0, %v650
      %v652 = vpop.f32.mrb[0].mxu0
      %v653 = vadd.f32 0.0, %v652
      %v654 = vpop.f32.mrb[0].mxu0
      %v655 = vpop.f32.mrb[0].mxu0
      %656 = vdwg.mxu0
      %657 = vmatprep.subr.bf16.mxu0 0
      %658 = vmatpush1.bf16.msra.mxu0 %v614
      %659 = vmatprep.subr.bf16.mxu0 0
      %660 = vmatpush1.bf16.msra.mxu0 0
      %661 = vmatprep.subr.bf16.mxu0 0
      %662 = vmatpush1.bf16.msra.mxu0 0
      %663 = vmatprep.subr.bf16.mxu0 0
      %664 = vmatpush1.bf16.msra.mxu0 0
      %665 = vmatprep.subr.bf16.mxu0 0
      %666 = vmatpush1.bf16.msra.mxu0 0
      %667 = vmatprep.subr.bf16.mxu0 0
      %668 = vmatpush1.bf16.msra.mxu0 0
      %669 = vmatprep.subr.bf16.mxu0 0
      %670 = vmatpush1.bf16.msra.mxu0 0
      %671 = vmatprep.subr.bf16.mxu0 0
      %672 = vmatpush1.bf16.msra.mxu0 0
      %673 = vmatprep.subr.bf16.mxu0 0
      %674 = vmatpush1.bf16.msra.mxu0 0
      %675 = vmatprep.subr.bf16.mxu0 0
      %676 = vmatpush1.bf16.msra.mxu0 0
      %677 = vmatprep.subr.bf16.mxu0 0
      %678 = vmatpush1.bf16.msra.mxu0 0
      %679 = vmatprep.subr.bf16.mxu0 0
      %680 = vmatpush1.bf16.msra.mxu0 0
      %681 = vmatprep.subr.bf16.mxu0 0
      %682 = vmatpush1.bf16.msra.mxu0 0
      %683 = vmatprep.subr.bf16.mxu0 0
      %684 = vmatpush1.bf16.msra.mxu0 0
      %685 = vmatprep.subr.bf16.mxu0 0
      %686 = vmatpush1.bf16.msra.mxu0 0
      %687 = vmatprep.subr.bf16.mxu0 0
      %688 = vmatpush1.bf16.msra.mxu0 0
      %689 = vmatprep.mubr.bf16.mxu0 0
      %690 = vmatmul.mubr.bf16.gmra.mrb[0].mxu0 %v605
      %v691 = vpop.f32.mrb[0].mxu0
      %v692 = vadd.f32 0.0, %v691
      %v693 = vpop.f32.mrb[0].mxu0
      %v694 = vpop.f32.mrb[0].mxu0
      %v695 = vpop.f32.mrb[0].mxu0
      %696 = vdwg.mxu0
      %v697 = vadd.f32 %v351, %v651
      %v698 = vadd.f32 %v353, %v653
      %v699 = vadd.f32 %v392, %v692
      %s700 = scalar_lea.vmem %s1, 16
      %v701 = vld [vmem:[%s700] sm:$0x3]
      %s702 = scalar_lea.vmem %s1, 6
      %v703 = vld [vmem:[%s702] sm:$0x3]
      %704 = vrot.lane.b32.xlu0 %v185, 109
      %v705 = vpop.permute.xlu0 %704
      %706 = vrot.lane.b32.xlu0 %v186, 109
      %v707 = vpop.permute.xlu0 %706
      %708 = vrot.lane.b32.xlu0 %v187, 109
      %v709 = vpop.permute.xlu0 %708
      %710 = vrot.lane.b32.xlu0 %v188, 109
      %v711 = vpop.permute.xlu0 %710
      %vm712 = vcmask 891904
      %v713 = vsel %vm712, %v705, %v707
      %v714 = vsel %vm712, %v707, %v709
      %v715 = vsel %vm712, %v709, %v711
      %v717 = vsel %vm201, %v703, 0
      %v720 = vsel %vm205, %v713, 0
      %v723 = vsel %vm205, %v714, 0
      %v726 = vsel %vm205, %v715, 0
      %728 = vmatprep.subr.bf16.mxu0 %v723
      %729 = vmatpush1.bf16.msra.mxu0 %v720
      %730 = vmatprep.subr.bf16.mxu0 0
      %731 = vmatpush1.bf16.msra.mxu0 0
      %732 = vmatprep.subr.bf16.mxu0 0
      %733 = vmatpush1.bf16.msra.mxu0 0
      %734 = vmatprep.subr.bf16.mxu0 0
      %735 = vmatpush1.bf16.msra.mxu0 0
      %736 = vmatprep.subr.bf16.mxu0 0
      %737 = vmatpush1.bf16.msra.mxu0 0
      %738 = vmatprep.subr.bf16.mxu0 0
      %739 = vmatpush1.bf16.msra.mxu0 0
      %740 = vmatprep.subr.bf16.mxu0 0
      %741 = vmatpush1.bf16.msra.mxu0 0
      %742 = vmatprep.subr.bf16.mxu0 0
      %743 = vmatpush1.bf16.msra.mxu0 0
      %744 = vmatprep.subr.bf16.mxu0 0
      %745 = vmatpush1.bf16.msra.mxu0 0
      %746 = vmatprep.subr.bf16.mxu0 0
      %747 = vmatpush1.bf16.msra.mxu0 0
      %748 = vmatprep.subr.bf16.mxu0 0
      %749 = vmatpush1.bf16.msra.mxu0 0
      %750 = vmatprep.subr.bf16.mxu0 0
      %751 = vmatpush1.bf16.msra.mxu0 0
      %752 = vmatprep.subr.bf16.mxu0 0
      %753 = vmatpush1.bf16.msra.mxu0 0
      %754 = vmatprep.subr.bf16.mxu0 0
      %755 = vmatpush1.bf16.msra.mxu0 0
      %756 = vmatprep.subr.bf16.mxu0 0
      %757 = vmatpush1.bf16.msra.mxu0 0
      %758 = vmatprep.subr.bf16.mxu0 0
      %759 = vmatpush1.bf16.msra.mxu0 0
      %760 = vmatprep.mubr.bf16.mxu0 0
      %761 = vmatmul.mubr.bf16.gmra.mrb[0].mxu0 %v717
      %v762 = vpop.f32.mrb[0].mxu0
      %v763 = vadd.f32 0.0, %v762
      %v764 = vpop.f32.mrb[0].mxu0
      %v765 = vadd.f32 0.0, %v764
      %v766 = vpop.f32.mrb[0].mxu0
      %v767 = vpop.f32.mrb[0].mxu0
      %768 = vdwg.mxu0
      %769 = vmatprep.subr.bf16.mxu0 0
      %770 = vmatpush1.bf16.msra.mxu0 %v726
      %771 = vmatprep.subr.bf16.mxu0 0
      %772 = vmatpush1.bf16.msra.mxu0 0
      %773 = vmatprep.subr.bf16.mxu0 0
      %774 = vmatpush1.bf16.msra.mxu0 0
      %775 = vmatprep.subr.bf16.mxu0 0
      %776 = vmatpush1.bf16.msra.mxu0 0
      %777 = vmatprep.subr.bf16.mxu0 0
      %778 = vmatpush1.bf16.msra.mxu0 0
      %779 = vmatprep.subr.bf16.mxu0 0
      %780 = vmatpush1.bf16.msra.mxu0 0
      %781 = vmatprep.subr.bf16.mxu0 0
      %782 = vmatpush1.bf16.msra.mxu0 0
      %783 = vmatprep.subr.bf16.mxu0 0
      %784 = vmatpush1.bf16.msra.mxu0 0
      %785 = vmatprep.subr.bf16.mxu0 0
      %786 = vmatpush1.bf16.msra.mxu0 0
      %787 = vmatprep.subr.bf16.mxu0 0
      %788 = vmatpush1.bf16.msra.mxu0 0
      %789 = vmatprep.subr.bf16.mxu0 0
      %790 = vmatpush1.bf16.msra.mxu0 0
      %791 = vmatprep.subr.bf16.mxu0 0
      %792 = vmatpush1.bf16.msra.mxu0 0
      %793 = vmatprep.subr.bf16.mxu0 0
      %794 = vmatpush1.bf16.msra.mxu0 0
      %795 = vmatprep.subr.bf16.mxu0 0
      %796 = vmatpush1.bf16.msra.mxu0 0
      %797 = vmatprep.subr.bf16.mxu0 0
      %798 = vmatpush1.bf16.msra.mxu0 0
      %799 = vmatprep.subr.bf16.mxu0 0
      %800 = vmatpush1.bf16.msra.mxu0 0
      %801 = vmatprep.mubr.bf16.mxu0 0
      %802 = vmatmul.mubr.bf16.gmra.mrb[0].mxu0 %v717
      %v803 = vpop.f32.mrb[0].mxu0
      %v804 = vadd.f32 0.0, %v803
      %v805 = vpop.f32.mrb[0].mxu0
      %v806 = vpop.f32.mrb[0].mxu0
      %v807 = vpop.f32.mrb[0].mxu0
      %808 = vdwg.mxu0
      %v809 = vadd.f32 %v697, %v763
      %v810 = vadd.f32 %v698, %v765
      %v811 = vadd.f32 %v699, %v804
      %s812 = scalar_lea.vmem %s1, 12
      %v813 = vld [vmem:[%s812] sm:$0x3]
      %v815 = vsel %vm201, %v813, 0
      %817 = vmatprep.subr.bf16.mxu0 %v723
      %818 = vmatpush1.bf16.msra.mxu0 %v720
      %819 = vmatprep.subr.bf16.mxu0 0
      %820 = vmatpush1.bf16.msra.mxu0 0
      %821 = vmatprep.subr.bf16.mxu0 0
      %822 = vmatpush1.bf16.msra.mxu0 0
      %823 = vmatprep.subr.bf16.mxu0 0
      %824 = vmatpush1.bf16.msra.mxu0 0
      %825 = vmatprep.subr.bf16.mxu0 0
      %826 = vmatpush1.bf16.msra.mxu0 0
      %827 = vmatprep.subr.bf16.mxu0 0
      %828 = vmatpush1.bf16.msra.mxu0 0
      %829 = vmatprep.subr.bf16.mxu0 0
      %830 = vmatpush1.bf16.msra.mxu0 0
      %831 = vmatprep.subr.bf16.mxu0 0
      %832 = vmatpush1.bf16.msra.mxu0 0
      %833 = vmatprep.subr.bf16.mxu0 0
      %834 = vmatpush1.bf16.msra.mxu0 0
      %835 = vmatprep.subr.bf16.mxu0 0
      %836 = vmatpush1.bf16.msra.mxu0 0
      %837 = vmatprep.subr.bf16.mxu0 0
      %838 = vmatpush1.bf16.msra.mxu0 0
      %839 = vmatprep.subr.bf16.mxu0 0
      %840 = vmatpush1.bf16.msra.mxu0 0
      %841 = vmatprep.subr.bf16.mxu0 0
      %842 = vmatpush1.bf16.msra.mxu0 0
      %843 = vmatprep.subr.bf16.mxu0 0
      %844 = vmatpush1.bf16.msra.mxu0 0
      %845 = vmatprep.subr.bf16.mxu0 0
      %846 = vmatpush1.bf16.msra.mxu0 0
      %847 = vmatprep.subr.bf16.mxu0 0
      %848 = vmatpush1.bf16.msra.mxu0 0
      %849 = vmatprep.mubr.bf16.mxu0 0
      %850 = vmatmul.mubr.bf16.gmra.mrb[0].mxu0 %v815
      %v851 = vpop.f32.mrb[0].mxu0
      %v852 = vadd.f32 0.0, %v851
      %v853 = vpop.f32.mrb[0].mxu0
      %v854 = vadd.f32 0.0, %v853
      %v855 = vpop.f32.mrb[0].mxu0
      %v856 = vpop.f32.mrb[0].mxu0
      %857 = vdwg.mxu0
      %858 = vmatprep.subr.bf16.mxu0 0
      %859 = vmatpush1.bf16.msra.mxu0 %v726
      %860 = vmatprep.subr.bf16.mxu0 0
      %861 = vmatpush1.bf16.msra.mxu0 0
      %862 = vmatprep.subr.bf16.mxu0 0
      %863 = vmatpush1.bf16.msra.mxu0 0
      %864 = vmatprep.subr.bf16.mxu0 0
      %865 = vmatpush1.bf16.msra.mxu0 0
      %866 = vmatprep.subr.bf16.mxu0 0
      %867 = vmatpush1.bf16.msra.mxu0 0
      %868 = vmatprep.subr.bf16.mxu0 0
      %869 = vmatpush1.bf16.msra.mxu0 0
      %870 = vmatprep.subr.bf16.mxu0 0
      %871 = vmatpush1.bf16.msra.mxu0 0
      %872 = vmatprep.subr.bf16.mxu0 0
      %873 = vmatpush1.bf16.msra.mxu0 0
      %874 = vmatprep.subr.bf16.mxu0 0
      %875 = vmatpush1.bf16.msra.mxu0 0
      %876 = vmatprep.subr.bf16.mxu0 0
      %877 = vmatpush1.bf16.msra.mxu0 0
      %878 = vmatprep.subr.bf16.mxu0 0
      %879 = vmatpush1.bf16.msra.mxu0 0
      %880 = vmatprep.subr.bf16.mxu0 0
      %881 = vmatpush1.bf16.msra.mxu0 0
      %882 = vmatprep.subr.bf16.mxu0 0
      %883 = vmatpush1.bf16.msra.mxu0 0
      %884 = vmatprep.subr.bf16.mxu0 0
      %885 = vmatpush1.bf16.msra.mxu0 0
      %886 = vmatprep.subr.bf16.mxu0 0
      %887 = vmatpush1.bf16.msra.mxu0 0
      %888 = vmatprep.subr.bf16.mxu0 0
      %889 = vmatpush1.bf16.msra.mxu0 0
      %890 = vmatprep.mubr.bf16.mxu0 0
      %891 = vmatmul.mubr.bf16.gmra.mrb[0].mxu0 %v815
      %v892 = vpop.f32.mrb[0].mxu0
      %v893 = vadd.f32 0.0, %v892
      %v894 = vpop.f32.mrb[0].mxu0
      %v895 = vpop.f32.mrb[0].mxu0
      %v896 = vpop.f32.mrb[0].mxu0
      %897 = vdwg.mxu0
      %v898 = vadd.f32 %v544, %v852
      %v899 = vadd.f32 %v546, %v854
      %v900 = vadd.f32 %v585, %v893
      %s901 = scalar_lea.vmem %s1, 18
      %v902 = vld [vmem:[%s901] sm:$0x3]
      %v904 = vsel %vm201, %v902, 0
      %906 = vmatprep.subr.bf16.mxu0 %v723
      %907 = vmatpush1.bf16.msra.mxu0 %v720
      %908 = vmatprep.subr.bf16.mxu0 0
      %909 = vmatpush1.bf16.msra.mxu0 0
      %910 = vmatprep.subr.bf16.mxu0 0
      %911 = vmatpush1.bf16.msra.mxu0 0
      %912 = vmatprep.subr.bf16.mxu0 0
      %913 = vmatpush1.bf16.msra.mxu0 0
      %914 = vmatprep.subr.bf16.mxu0 0
      %915 = vmatpush1.bf16.msra.mxu0 0
      %916 = vmatprep.subr.bf16.mxu0 0
      %917 = vmatpush1.bf16.msra.mxu0 0
      %918 = vmatprep.subr.bf16.mxu0 0
      %919 = vmatpush1.bf16.msra.mxu0 0
      %920 = vmatprep.subr.bf16.mxu0 0
      %921 = vmatpush1.bf16.msra.mxu0 0
      %922 = vmatprep.subr.bf16.mxu0 0
      %923 = vmatpush1.bf16.msra.mxu0 0
      %924 = vmatprep.subr.bf16.mxu0 0
      %925 = vmatpush1.bf16.msra.mxu0 0
      %926 = vmatprep.subr.bf16.mxu0 0
      %927 = vmatpush1.bf16.msra.mxu0 0
      %928 = vmatprep.subr.bf16.mxu0 0
      %929 = vmatpush1.bf16.msra.mxu0 0
      %930 = vmatprep.subr.bf16.mxu0 0
      %931 = vmatpush1.bf16.msra.mxu0 0
      %932 = vmatprep.subr.bf16.mxu0 0
      %933 = vmatpush1.bf16.msra.mxu0 0
      %934 = vmatprep.subr.bf16.mxu0 0
      %935 = vmatpush1.bf16.msra.mxu0 0
      %936 = vmatprep.subr.bf16.mxu0 0
      %937 = vmatpush1.bf16.msra.mxu0 0
      %938 = vmatprep.mubr.bf16.mxu0 0
      %939 = vmatmul.mubr.bf16.gmra.mrb[0].mxu0 %v904
      %v940 = vpop.f32.mrb[0].mxu0
      %v941 = vadd.f32 0.0, %v940
      %v942 = vpop.f32.mrb[0].mxu0
      %v943 = vadd.f32 0.0, %v942
      %v944 = vpop.f32.mrb[0].mxu0
      %v945 = vpop.f32.mrb[0].mxu0
      %946 = vdwg.mxu0
      %947 = vmatprep.subr.bf16.mxu0 0
      %948 = vmatpush1.bf16.msra.mxu0 %v726
      %949 = vmatprep.subr.bf16.mxu0 0
      %950 = vmatpush1.bf16.msra.mxu0 0
      %951 = vmatprep.subr.bf16.mxu0 0
      %952 = vmatpush1.bf16.msra.mxu0 0
      %953 = vmatprep.subr.bf16.mxu0 0
      %954 = vmatpush1.bf16.msra.mxu0 0
      %955 = vmatprep.subr.bf16.mxu0 0
      %956 = vmatpush1.bf16.msra.mxu0 0
      %957 = vmatprep.subr.bf16.mxu0 0
      %958 = vmatpush1.bf16.msra.mxu0 0
      %959 = vmatprep.subr.bf16.mxu0 0
      %960 = vmatpush1.bf16.msra.mxu0 0
      %961 = vmatprep.subr.bf16.mxu0 0
      %962 = vmatpush1.bf16.msra.mxu0 0
      %963 = vmatprep.subr.bf16.mxu0 0
      %964 = vmatpush1.bf16.msra.mxu0 0
      %965 = vmatprep.subr.bf16.mxu0 0
      %966 = vmatpush1.bf16.msra.mxu0 0
      %967 = vmatprep.subr.bf16.mxu0 0
      %968 = vmatpush1.bf16.msra.mxu0 0
      %969 = vmatprep.subr.bf16.mxu0 0
      %970 = vmatpush1.bf16.msra.mxu0 0
      %971 = vmatprep.subr.bf16.mxu0 0
      %972 = vmatpush1.bf16.msra.mxu0 0
      %973 = vmatprep.subr.bf16.mxu0 0
      %974 = vmatpush1.bf16.msra.mxu0 0
      %975 = vmatprep.subr.bf16.mxu0 0
      %976 = vmatpush1.bf16.msra.mxu0 0
      %977 = vmatprep.subr.bf16.mxu0 0
      %978 = vmatpush1.bf16.msra.mxu0 0
      %979 = vmatprep.mubr.bf16.mxu0 0
      %980 = vmatmul.mubr.bf16.gmra.mrb[0].mxu0 %v904
      %v981 = vpop.f32.mrb[0].mxu0
      %v982 = vadd.f32 0.0, %v981
      %v983 = vpop.f32.mrb[0].mxu0
      %v984 = vpop.f32.mrb[0].mxu0
      %v985 = vpop.f32.mrb[0].mxu0
      %986 = vdwg.mxu0
      %v988 = vsel %vm201, %v701, 0
      %990 = vmatprep.subr.bf16.mxu0 %v611
      %991 = vmatpush1.bf16.msra.mxu0 %v608
      %992 = vmatprep.subr.bf16.mxu0 0
      %993 = vmatpush1.bf16.msra.mxu0 0
      %994 = vmatprep.subr.bf16.mxu0 0
      %995 = vmatpush1.bf16.msra.mxu0 0
      %996 = vmatprep.subr.bf16.mxu0 0
      %997 = vmatpush1.bf16.msra.mxu0 0
      %998 = vmatprep.subr.bf16.mxu0 0
      %999 = vmatpush1.bf16.msra.mxu0 0
      %1000 = vmatprep.subr.bf16.mxu0 0
      %1001 = vmatpush1.bf16.msra.mxu0 0
      %1002 = vmatprep.subr.bf16.mxu0 0
      %1003 = vmatpush1.bf16.msra.mxu0 0
      %1004 = vmatprep.subr.bf16.mxu0 0
      %1005 = vmatpush1.bf16.msra.mxu0 0
      %1006 = vmatprep.subr.bf16.mxu0 0
      %1007 = vmatpush1.bf16.msra.mxu0 0
      %1008 = vmatprep.subr.bf16.mxu0 0
      %1009 = vmatpush1.bf16.msra.mxu0 0
      %1010 = vmatprep.subr.bf16.mxu0 0
      %1011 = vmatpush1.bf16.msra.mxu0 0
      %1012 = vmatprep.subr.bf16.mxu0 0
      %1013 = vmatpush1.bf16.msra.mxu0 0
      %1014 = vmatprep.subr.bf16.mxu0 0
      %1015 = vmatpush1.bf16.msra.mxu0 0
      %1016 = vmatprep.subr.bf16.mxu0 0
      %1017 = vmatpush1.bf16.msra.mxu0 0
      %1018 = vmatprep.subr.bf16.mxu0 0
      %1019 = vmatpush1.bf16.msra.mxu0 0
      %1020 = vmatprep.subr.bf16.mxu0 0
      %1021 = vmatpush1.bf16.msra.mxu0 0
      %1022 = vmatprep.mubr.bf16.mxu0 0
      %1023 = vmatmul.mubr.bf16.gmra.mrb[0].mxu0 %v988
      %v1024 = vpop.f32.mrb[0].mxu0
      %v1025 = vadd.f32 %v941, %v1024
      %v1026 = vpop.f32.mrb[0].mxu0
      %v1027 = vadd.f32 %v943, %v1026
      %v1028 = vpop.f32.mrb[0].mxu0
      %v1029 = vpop.f32.mrb[0].mxu0
      %1030 = vdwg.mxu0
      %1031 = vmatprep.subr.bf16.mxu0 0
      %1032 = vmatpush1.bf16.msra.mxu0 %v614
      %1033 = vmatprep.subr.bf16.mxu0 0
      %1034 = vmatpush1.bf16.msra.mxu0 0
      %1035 = vmatprep.subr.bf16.mxu0 0
      %1036 = vmatpush1.bf16.msra.mxu0 0
      %1037 = vmatprep.subr.bf16.mxu0 0
      %1038 = vmatpush1.bf16.msra.mxu0 0
      %1039 = vmatprep.subr.bf16.mxu0 0
      %1040 = vmatpush1.bf16.msra.mxu0 0
      %1041 = vmatprep.subr.bf16.mxu0 0
      %1042 = vmatpush1.bf16.msra.mxu0 0
      %1043 = vmatprep.subr.bf16.mxu0 0
      %1044 = vmatpush1.bf16.msra.mxu0 0
      %1045 = vmatprep.subr.bf16.mxu0 0
      %1046 = vmatpush1.bf16.msra.mxu0 0
      %1047 = vmatprep.subr.bf16.mxu0 0
      %1048 = vmatpush1.bf16.msra.mxu0 0
      %1049 = vmatprep.subr.bf16.mxu0 0
      %1050 = vmatpush1.bf16.msra.mxu0 0
      %1051 = vmatprep.subr.bf16.mxu0 0
      %1052 = vmatpush1.bf16.msra.mxu0 0
      %1053 = vmatprep.subr.bf16.mxu0 0
      %1054 = vmatpush1.bf16.msra.mxu0 0
      %1055 = vmatprep.subr.bf16.mxu0 0
      %1056 = vmatpush1.bf16.msra.mxu0 0
      %1057 = vmatprep.subr.bf16.mxu0 0
      %1058 = vmatpush1.bf16.msra.mxu0 0
      %1059 = vmatprep.subr.bf16.mxu0 0
      %1060 = vmatpush1.bf16.msra.mxu0 0
      %1061 = vmatprep.subr.bf16.mxu0 0
      %1062 = vmatpush1.bf16.msra.mxu0 0
      %1063 = vmatprep.mubr.bf16.mxu0 0
      %1064 = vmatmul.mubr.bf16.gmra.mrb[0].mxu0 %v988
      %v1065 = vpop.f32.mrb[0].mxu0
      %v1066 = vadd.f32 %v982, %v1065
      %v1067 = vpop.f32.mrb[0].mxu0
      %v1068 = vpop.f32.mrb[0].mxu0
      %v1069 = vpop.f32.mrb[0].mxu0
      %1070 = vdwg.mxu0
      %s1071 = scalar_lea.vmem %s1, 24
      %v1072 = vld [vmem:[%s1071] sm:$0x3]
      %s1073 = scalar_lea.vmem %s1, 14
      %v1074 = vld [vmem:[%s1073] sm:$0x3]
      %1075 = vrot.lane.b32.xlu0 %v185, 108
      %v1076 = vpop.permute.xlu0 %1075
      %1077 = vrot.lane.b32.xlu0 %v186, 108
      %v1078 = vpop.permute.xlu0 %1077
      %1079 = vrot.lane.b32.xlu0 %v187, 108
      %v1080 = vpop.permute.xlu0 %1079
      %1081 = vrot.lane.b32.xlu0 %v188, 108
      %v1082 = vpop.permute.xlu0 %1081
      %vm1083 = vcmask 883712
      %v1084 = vsel %vm1083, %v1076, %v1078
      %v1085 = vsel %vm1083, %v1078, %v1080
      %v1086 = vsel %vm1083, %v1080, %v1082
      %v1088 = vsel %vm201, %v1074, 0
      %v1091 = vsel %vm205, %v1084, 0
      %v1094 = vsel %vm205, %v1085, 0
      %v1097 = vsel %vm205, %v1086, 0
      %1099 = vmatprep.subr.bf16.mxu0 %v1094
      %1100 = vmatpush1.bf16.msra.mxu0 %v1091
      %1101 = vmatprep.subr.bf16.mxu0 0
      %1102 = vmatpush1.bf16.msra.mxu0 0
      %1103 = vmatprep.subr.bf16.mxu0 0
      %1104 = vmatpush1.bf16.msra.mxu0 0
      %1105 = vmatprep.subr.bf16.mxu0 0
      %1106 = vmatpush1.bf16.msra.mxu0 0
      %1107 = vmatprep.subr.bf16.mxu0 0
      %1108 = vmatpush1.bf16.msra.mxu0 0
      %1109 = vmatprep.subr.bf16.mxu0 0
      %1110 = vmatpush1.bf16.msra.mxu0 0
      %1111 = vmatprep.subr.bf16.mxu0 0
      %1112 = vmatpush1.bf16.msra.mxu0 0
      %1113 = vmatprep.subr.bf16.mxu0 0
      %1114 = vmatpush1.bf16.msra.mxu0 0
      %1115 = vmatprep.subr.bf16.mxu0 0
      %1116 = vmatpush1.bf16.msra.mxu0 0
      %1117 = vmatprep.subr.bf16.mxu0 0
      %1118 = vmatpush1.bf16.msra.mxu0 0
      %1119 = vmatprep.subr.bf16.mxu0 0
      %1120 = vmatpush1.bf16.msra.mxu0 0
      %1121 = vmatprep.subr.bf16.mxu0 0
      %1122 = vmatpush1.bf16.msra.mxu0 0
      %1123 = vmatprep.subr.bf16.mxu0 0
      %1124 = vmatpush1.bf16.msra.mxu0 0
      %1125 = vmatprep.subr.bf16.mxu0 0
      %1126 = vmatpush1.bf16.msra.mxu0 0
      %1127 = vmatprep.subr.bf16.mxu0 0
      %1128 = vmatpush1.bf16.msra.mxu0 0
      %1129 = vmatprep.subr.bf16.mxu0 0
      %1130 = vmatpush1.bf16.msra.mxu0 0
      %1131 = vmatprep.mubr.bf16.mxu0 0
      %1132 = vmatmul.mubr.bf16.gmra.mrb[0].mxu0 %v1088
      %v1133 = vpop.f32.mrb[0].mxu0
      %v1134 = vadd.f32 0.0, %v1133
      %v1135 = vpop.f32.mrb[0].mxu0
      %v1136 = vadd.f32 0.0, %v1135
      %v1137 = vpop.f32.mrb[0].mxu0
      %v1138 = vpop.f32.mrb[0].mxu0
      %1139 = vdwg.mxu0
      %1140 = vmatprep.subr.bf16.mxu0 0
      %1141 = vmatpush1.bf16.msra.mxu0 %v1097
      %1142 = vmatprep.subr.bf16.mxu0 0
      %1143 = vmatpush1.bf16.msra.mxu0 0
      %1144 = vmatprep.subr.bf16.mxu0 0
      %1145 = vmatpush1.bf16.msra.mxu0 0
      %1146 = vmatprep.subr.bf16.mxu0 0
      %1147 = vmatpush1.bf16.msra.mxu0 0
      %1148 = vmatprep.subr.bf16.mxu0 0
      %1149 = vmatpush1.bf16.msra.mxu0 0
      %1150 = vmatprep.subr.bf16.mxu0 0
      %1151 = vmatpush1.bf16.msra.mxu0 0
      %1152 = vmatprep.subr.bf16.mxu0 0
      %1153 = vmatpush1.bf16.msra.mxu0 0
      %1154 = vmatprep.subr.bf16.mxu0 0
      %1155 = vmatpush1.bf16.msra.mxu0 0
      %1156 = vmatprep.subr.bf16.mxu0 0
      %1157 = vmatpush1.bf16.msra.mxu0 0
      %1158 = vmatprep.subr.bf16.mxu0 0
      %1159 = vmatpush1.bf16.msra.mxu0 0
      %1160 = vmatprep.subr.bf16.mxu0 0
      %1161 = vmatpush1.bf16.msra.mxu0 0
      %1162 = vmatprep.subr.bf16.mxu0 0
      %1163 = vmatpush1.bf16.msra.mxu0 0
      %1164 = vmatprep.subr.bf16.mxu0 0
      %1165 = vmatpush1.bf16.msra.mxu0 0
      %1166 = vmatprep.subr.bf16.mxu0 0
      %1167 = vmatpush1.bf16.msra.mxu0 0
      %1168 = vmatprep.subr.bf16.mxu0 0
      %1169 = vmatpush1.bf16.msra.mxu0 0
      %1170 = vmatprep.subr.bf16.mxu0 0
      %1171 = vmatpush1.bf16.msra.mxu0 0
      %1172 = vmatprep.mubr.bf16.mxu0 0
      %1173 = vmatmul.mubr.bf16.gmra.mrb[0].mxu0 %v1088
      %v1174 = vpop.f32.mrb[0].mxu0
      %v1175 = vadd.f32 0.0, %v1174
      %v1176 = vpop.f32.mrb[0].mxu0
      %v1177 = vpop.f32.mrb[0].mxu0
      %v1178 = vpop.f32.mrb[0].mxu0
      %1179 = vdwg.mxu0
      %v1180 = vadd.f32 %v898, %v1134
      %v1181 = vadd.f32 %v899, %v1136
      %v1182 = vadd.f32 %v900, %v1175
      %s1183 = scalar_lea.vmem %s1, 26
      %v1184 = vld [vmem:[%s1183] sm:$0x3]
      %v1186 = vsel %vm201, %v1184, 0
      %1188 = vmatprep.subr.bf16.mxu0 %v1094
      %1189 = vmatpush1.bf16.msra.mxu0 %v1091
      %1190 = vmatprep.subr.bf16.mxu0 0
      %1191 = vmatpush1.bf16.msra.mxu0 0
      %1192 = vmatprep.subr.bf16.mxu0 0
      %1193 = vmatpush1.bf16.msra.mxu0 0
      %1194 = vmatprep.subr.bf16.mxu0 0
      %1195 = vmatpush1.bf16.msra.mxu0 0
      %1196 = vmatprep.subr.bf16.mxu0 0
      %1197 = vmatpush1.bf16.msra.mxu0 0
      %1198 = vmatprep.subr.bf16.mxu0 0
      %1199 = vmatpush1.bf16.msra.mxu0 0
      %1200 = vmatprep.subr.bf16.mxu0 0
      %1201 = vmatpush1.bf16.msra.mxu0 0
      %1202 = vmatprep.subr.bf16.mxu0 0
      %1203 = vmatpush1.bf16.msra.mxu0 0
      %1204 = vmatprep.subr.bf16.mxu0 0
      %1205 = vmatpush1.bf16.msra.mxu0 0
      %1206 = vmatprep.subr.bf16.mxu0 0
      %1207 = vmatpush1.bf16.msra.mxu0 0
      %1208 = vmatprep.subr.bf16.mxu0 0
      %1209 = vmatpush1.bf16.msra.mxu0 0
      %1210 = vmatprep.subr.bf16.mxu0 0
      %1211 = vmatpush1.bf16.msra.mxu0 0
      %1212 = vmatprep.subr.bf16.mxu0 0
      %1213 = vmatpush1.bf16.msra.mxu0 0
      %1214 = vmatprep.subr.bf16.mxu0 0
      %1215 = vmatpush1.bf16.msra.mxu0 0
      %1216 = vmatprep.subr.bf16.mxu0 0
      %1217 = vmatpush1.bf16.msra.mxu0 0
      %1218 = vmatprep.subr.bf16.mxu0 0
      %1219 = vmatpush1.bf16.msra.mxu0 0
      %1220 = vmatprep.mubr.bf16.mxu0 0
      %1221 = vmatmul.mubr.bf16.gmra.mrb[0].mxu0 %v1186
      %v1222 = vpop.f32.mrb[0].mxu0
      %v1223 = vadd.f32 0.0, %v1222
      %v1224 = vpop.f32.mrb[0].mxu0
      %v1225 = vadd.f32 0.0, %v1224
      %v1226 = vpop.f32.mrb[0].mxu0
      %v1227 = vpop.f32.mrb[0].mxu0
      %1228 = vdwg.mxu0
      %1229 = vmatprep.subr.bf16.mxu0 0
      %1230 = vmatpush1.bf16.msra.mxu0 %v1097
      %1231 = vmatprep.subr.bf16.mxu0 0
      %1232 = vmatpush1.bf16.msra.mxu0 0
      %1233 = vmatprep.subr.bf16.mxu0 0
      %1234 = vmatpush1.bf16.msra.mxu0 0
      %1235 = vmatprep.subr.bf16.mxu0 0
      %1236 = vmatpush1.bf16.msra.mxu0 0
      %1237 = vmatprep.subr.bf16.mxu0 0
      %1238 = vmatpush1.bf16.msra.mxu0 0
      %1239 = vmatprep.subr.bf16.mxu0 0
      %1240 = vmatpush1.bf16.msra.mxu0 0
      %1241 = vmatprep.subr.bf16.mxu0 0
      %1242 = vmatpush1.bf16.msra.mxu0 0
      %1243 = vmatprep.subr.bf16.mxu0 0
      %1244 = vmatpush1.bf16.msra.mxu0 0
      %1245 = vmatprep.subr.bf16.mxu0 0
      %1246 = vmatpush1.bf16.msra.mxu0 0
      %1247 = vmatprep.subr.bf16.mxu0 0
      %1248 = vmatpush1.bf16.msra.mxu0 0
      %1249 = vmatprep.subr.bf16.mxu0 0
      %1250 = vmatpush1.bf16.msra.mxu0 0
      %1251 = vmatprep.subr.bf16.mxu0 0
      %1252 = vmatpush1.bf16.msra.mxu0 0
      %1253 = vmatprep.subr.bf16.mxu0 0
      %1254 = vmatpush1.bf16.msra.mxu0 0
      %1255 = vmatprep.subr.bf16.mxu0 0
      %1256 = vmatpush1.bf16.msra.mxu0 0
      %1257 = vmatprep.subr.bf16.mxu0 0
      %1258 = vmatpush1.bf16.msra.mxu0 0
      %1259 = vmatprep.subr.bf16.mxu0 0
      %1260 = vmatpush1.bf16.msra.mxu0 0
      %1261 = vmatprep.mubr.bf16.mxu0 0
      %1262 = vmatmul.mubr.bf16.gmra.mrb[0].mxu0 %v1186
      %v1263 = vpop.f32.mrb[0].mxu0
      %v1264 = vadd.f32 0.0, %v1263
      %v1265 = vpop.f32.mrb[0].mxu0
      %v1266 = vpop.f32.mrb[0].mxu0
      %v1267 = vpop.f32.mrb[0].mxu0
      %1268 = vdwg.mxu0
      %v1270 = vsel %vm201, %v1072, 0
      %1272 = vmatprep.subr.bf16.mxu0 %v723
      %1273 = vmatpush1.bf16.msra.mxu0 %v720
      %1274 = vmatprep.subr.bf16.mxu0 0
      %1275 = vmatpush1.bf16.msra.mxu0 0
      %1276 = vmatprep.subr.bf16.mxu0 0
      %1277 = vmatpush1.bf16.msra.mxu0 0
      %1278 = vmatprep.subr.bf16.mxu0 0
      %1279 = vmatpush1.bf16.msra.mxu0 0
      %1280 = vmatprep.subr.bf16.mxu0 0
      %1281 = vmatpush1.bf16.msra.mxu0 0
      %1282 = vmatprep.subr.bf16.mxu0 0
      %1283 = vmatpush1.bf16.msra.mxu0 0
      %1284 = vmatprep.subr.bf16.mxu0 0
      %1285 = vmatpush1.bf16.msra.mxu0 0
      %1286 = vmatprep.subr.bf16.mxu0 0
      %1287 = vmatpush1.bf16.msra.mxu0 0
      %1288 = vmatprep.subr.bf16.mxu0 0
      %1289 = vmatpush1.bf16.msra.mxu0 0
      %1290 = vmatprep.subr.bf16.mxu0 0
      %1291 = vmatpush1.bf16.msra.mxu0 0
      %1292 = vmatprep.subr.bf16.mxu0 0
      %1293 = vmatpush1.bf16.msra.mxu0 0
      %1294 = vmatprep.subr.bf16.mxu0 0
      %1295 = vmatpush1.bf16.msra.mxu0 0
      %1296 = vmatprep.subr.bf16.mxu0 0
      %1297 = vmatpush1.bf16.msra.mxu0 0
      %1298 = vmatprep.subr.bf16.mxu0 0
      %1299 = vmatpush1.bf16.msra.mxu0 0
      %1300 = vmatprep.subr.bf16.mxu0 0
      %1301 = vmatpush1.bf16.msra.mxu0 0
      %1302 = vmatprep.subr.bf16.mxu0 0
      %1303 = vmatpush1.bf16.msra.mxu0 0
      %1304 = vmatprep.mubr.bf16.mxu0 0
      %1305 = vmatmul.mubr.bf16.gmra.mrb[0].mxu0 %v1270
      %v1306 = vpop.f32.mrb[0].mxu0
      %v1307 = vadd.f32 %v1223, %v1306
      %v1308 = vpop.f32.mrb[0].mxu0
      %v1309 = vadd.f32 %v1225, %v1308
      %v1310 = vpop.f32.mrb[0].mxu0
      %v1311 = vpop.f32.mrb[0].mxu0
      %1312 = vdwg.mxu0
      %1313 = vmatprep.subr.bf16.mxu0 0
      %1314 = vmatpush1.bf16.msra.mxu0 %v726
      %1315 = vmatprep.subr.bf16.mxu0 0
      %1316 = vmatpush1.bf16.msra.mxu0 0
      %1317 = vmatprep.subr.bf16.mxu0 0
      %1318 = vmatpush1.bf16.msra.mxu0 0
      %1319 = vmatprep.subr.bf16.mxu0 0
      %1320 = vmatpush1.bf16.msra.mxu0 0
      %1321 = vmatprep.subr.bf16.mxu0 0
      %1322 = vmatpush1.bf16.msra.mxu0 0
      %1323 = vmatprep.subr.bf16.mxu0 0
      %1324 = vmatpush1.bf16.msra.mxu0 0
      %1325 = vmatprep.subr.bf16.mxu0 0
      %1326 = vmatpush1.bf16.msra.mxu0 0
      %1327 = vmatprep.subr.bf16.mxu0 0
      %1328 = vmatpush1.bf16.msra.mxu0 0
      %1329 = vmatprep.subr.bf16.mxu0 0
      %1330 = vmatpush1.bf16.msra.mxu0 0
      %1331 = vmatprep.subr.bf16.mxu0 0
      %1332 = vmatpush1.bf16.msra.mxu0 0
      %1333 = vmatprep.subr.bf16.mxu0 0
      %1334 = vmatpush1.bf16.msra.mxu0 0
      %1335 = vmatprep.subr.bf16.mxu0 0
      %1336 = vmatpush1.bf16.msra.mxu0 0
      %1337 = vmatprep.subr.bf16.mxu0 0
      %1338 = vmatpush1.bf16.msra.mxu0 0
      %1339 = vmatprep.subr.bf16.mxu0 0
      %1340 = vmatpush1.bf16.msra.mxu0 0
      %1341 = vmatprep.subr.bf16.mxu0 0
      %1342 = vmatpush1.bf16.msra.mxu0 0
      %1343 = vmatprep.subr.bf16.mxu0 0
      %1344 = vmatpush1.bf16.msra.mxu0 0
      %1345 = vmatprep.mubr.bf16.mxu0 0
      %1346 = vmatmul.mubr.bf16.gmra.mrb[0].mxu0 %v1270
      %v1347 = vpop.f32.mrb[0].mxu0
      %v1348 = vadd.f32 %v1264, %v1347
      %v1349 = vpop.f32.mrb[0].mxu0
      %v1350 = vpop.f32.mrb[0].mxu0
      %v1351 = vpop.f32.mrb[0].mxu0
      %1352 = vdwg.mxu0
      %s1353 = scalar_lea.vmem %s1, 20
      %v1354 = vld [vmem:[%s1353] sm:$0x3]
      %1355 = vrot.lane.b32.xlu0 %v185, 92
      %v1356 = vpop.permute.xlu0 %1355
      %1357 = vrot.lane.b32.xlu0 %v186, 92
      %v1358 = vpop.permute.xlu0 %1357
      %1359 = vrot.lane.b32.xlu0 %v187, 92
      %v1360 = vpop.permute.xlu0 %1359
      %1361 = vrot.lane.b32.xlu0 %v188, 92
      %v1362 = vpop.permute.xlu0 %1361
      %vm1363 = vcmask 752640
      %v1364 = vsel %vm1363, %v1356, %v1358
      %v1365 = vsel %vm1363, %v1358, %v1360
      %v1366 = vsel %vm1363, %v1360, %v1362
      %v1368 = vsel %vm201, %v1354, 0
      %v1371 = vsel %vm205, %v1364, 0
      %v1374 = vsel %vm205, %v1365, 0
      %v1377 = vsel %vm205, %v1366, 0
      %1379 = vmatprep.subr.bf16.mxu0 %v1374
      %1380 = vmatpush1.bf16.msra.mxu0 %v1371
      %1381 = vmatprep.subr.bf16.mxu0 0
      %1382 = vmatpush1.bf16.msra.mxu0 0
      %1383 = vmatprep.subr.bf16.mxu0 0
      %1384 = vmatpush1.bf16.msra.mxu0 0
      %1385 = vmatprep.subr.bf16.mxu0 0
      %1386 = vmatpush1.bf16.msra.mxu0 0
      %1387 = vmatprep.subr.bf16.mxu0 0
      %1388 = vmatpush1.bf16.msra.mxu0 0
      %1389 = vmatprep.subr.bf16.mxu0 0
      %1390 = vmatpush1.bf16.msra.mxu0 0
      %1391 = vmatprep.subr.bf16.mxu0 0
      %1392 = vmatpush1.bf16.msra.mxu0 0
      %1393 = vmatprep.subr.bf16.mxu0 0
      %1394 = vmatpush1.bf16.msra.mxu0 0
      %1395 = vmatprep.subr.bf16.mxu0 0
      %1396 = vmatpush1.bf16.msra.mxu0 0
      %1397 = vmatprep.subr.bf16.mxu0 0
      %1398 = vmatpush1.bf16.msra.mxu0 0
      %1399 = vmatprep.subr.bf16.mxu0 0
      %1400 = vmatpush1.bf16.msra.mxu0 0
      %1401 = vmatprep.subr.bf16.mxu0 0
      %1402 = vmatpush1.bf16.msra.mxu0 0
      %1403 = vmatprep.subr.bf16.mxu0 0
      %1404 = vmatpush1.bf16.msra.mxu0 0
      %1405 = vmatprep.subr.bf16.mxu0 0
      %1406 = vmatpush1.bf16.msra.mxu0 0
      %1407 = vmatprep.subr.bf16.mxu0 0
      %1408 = vmatpush1.bf16.msra.mxu0 0
      %1409 = vmatprep.subr.bf16.mxu0 0
      %1410 = vmatpush1.bf16.msra.mxu0 0
      %1411 = vmatprep.mubr.bf16.mxu0 0
      %1412 = vmatmul.mubr.bf16.gmra.mrb[0].mxu0 %v1368
      %v1413 = vpop.f32.mrb[0].mxu0
      %v1414 = vadd.f32 0.0, %v1413
      %v1415 = vpop.f32.mrb[0].mxu0
      %v1416 = vadd.f32 0.0, %v1415
      %v1417 = vpop.f32.mrb[0].mxu0
      %v1418 = vpop.f32.mrb[0].mxu0
      %1419 = vdwg.mxu0
      %1420 = vmatprep.subr.bf16.mxu0 0
      %1421 = vmatpush1.bf16.msra.mxu0 %v1377
      %1422 = vmatprep.subr.bf16.mxu0 0
      %1423 = vmatpush1.bf16.msra.mxu0 0
      %1424 = vmatprep.subr.bf16.mxu0 0
      %1425 = vmatpush1.bf16.msra.mxu0 0
      %1426 = vmatprep.subr.bf16.mxu0 0
      %1427 = vmatpush1.bf16.msra.mxu0 0
      %1428 = vmatprep.subr.bf16.mxu0 0
      %1429 = vmatpush1.bf16.msra.mxu0 0
      %1430 = vmatprep.subr.bf16.mxu0 0
      %1431 = vmatpush1.bf16.msra.mxu0 0
      %1432 = vmatprep.subr.bf16.mxu0 0
      %1433 = vmatpush1.bf16.msra.mxu0 0
      %1434 = vmatprep.subr.bf16.mxu0 0
      %1435 = vmatpush1.bf16.msra.mxu0 0
      %1436 = vmatprep.subr.bf16.mxu0 0
      %1437 = vmatpush1.bf16.msra.mxu0 0
      %1438 = vmatprep.subr.bf16.mxu0 0
      %1439 = vmatpush1.bf16.msra.mxu0 0
      %1440 = vmatprep.subr.bf16.mxu0 0
      %1441 = vmatpush1.bf16.msra.mxu0 0
      %1442 = vmatprep.subr.bf16.mxu0 0
      %1443 = vmatpush1.bf16.msra.mxu0 0
      %1444 = vmatprep.subr.bf16.mxu0 0
      %1445 = vmatpush1.bf16.msra.mxu0 0
      %1446 = vmatprep.subr.bf16.mxu0 0
      %1447 = vmatpush1.bf16.msra.mxu0 0
      %1448 = vmatprep.subr.bf16.mxu0 0
      %1449 = vmatpush1.bf16.msra.mxu0 0
      %1450 = vmatprep.subr.bf16.mxu0 0
      %1451 = vmatpush1.bf16.msra.mxu0 0
      %1452 = vmatprep.mubr.bf16.mxu0 0
      %1453 = vmatmul.mubr.bf16.gmra.mrb[0].mxu0 %v1368
      %v1454 = vpop.f32.mrb[0].mxu0
      %v1455 = vadd.f32 0.0, %v1454
      %v1456 = vpop.f32.mrb[0].mxu0
      %v1457 = vpop.f32.mrb[0].mxu0
      %v1458 = vpop.f32.mrb[0].mxu0
      %1459 = vdwg.mxu0
      %v1460 = vadd.f32 %v1025, %v1414
      %v1461 = vadd.f32 %v1027, %v1416
      %v1462 = vadd.f32 %v1066, %v1455
      %s1463 = scalar_lea.vmem %s1, 22
      %v1464 = vld [vmem:[%s1463] sm:$0x3]
      %1465 = vrot.lane.b32.xlu0 %v185, 91
      %v1466 = vpop.permute.xlu0 %1465
      %1467 = vrot.lane.b32.xlu0 %v186, 91
      %v1468 = vpop.permute.xlu0 %1467
      %1469 = vrot.lane.b32.xlu0 %v187, 91
      %v1470 = vpop.permute.xlu0 %1469
      %1471 = vrot.lane.b32.xlu0 %v188, 91
      %v1472 = vpop.permute.xlu0 %1471
      %vm1473 = vcmask 744448
      %v1474 = vsel %vm1473, %v1466, %v1468
      %v1475 = vsel %vm1473, %v1468, %v1470
      %v1476 = vsel %vm1473, %v1470, %v1472
      %v1478 = vsel %vm201, %v1464, 0
      %v1481 = vsel %vm205, %v1474, 0
      %v1484 = vsel %vm205, %v1475, 0
      %v1487 = vsel %vm205, %v1476, 0
      %1489 = vmatprep.subr.bf16.mxu0 %v1484
      %1490 = vmatpush1.bf16.msra.mxu0 %v1481
      %1491 = vmatprep.subr.bf16.mxu0 0
      %1492 = vmatpush1.bf16.msra.mxu0 0
      %1493 = vmatprep.subr.bf16.mxu0 0
      %1494 = vmatpush1.bf16.msra.mxu0 0
      %1495 = vmatprep.subr.bf16.mxu0 0
      %1496 = vmatpush1.bf16.msra.mxu0 0
      %1497 = vmatprep.subr.bf16.mxu0 0
      %1498 = vmatpush1.bf16.msra.mxu0 0
      %1499 = vmatprep.subr.bf16.mxu0 0
      %1500 = vmatpush1.bf16.msra.mxu0 0
      %1501 = vmatprep.subr.bf16.mxu0 0
      %1502 = vmatpush1.bf16.msra.mxu0 0
      %1503 = vmatprep.subr.bf16.mxu0 0
      %1504 = vmatpush1.bf16.msra.mxu0 0
      %1505 = vmatprep.subr.bf16.mxu0 0
      %1506 = vmatpush1.bf16.msra.mxu0 0
      %1507 = vmatprep.subr.bf16.mxu0 0
      %1508 = vmatpush1.bf16.msra.mxu0 0
      %1509 = vmatprep.subr.bf16.mxu0 0
      %1510 = vmatpush1.bf16.msra.mxu0 0
      %1511 = vmatprep.subr.bf16.mxu0 0
      %1512 = vmatpush1.bf16.msra.mxu0 0
      %1513 = vmatprep.subr.bf16.mxu0 0
      %1514 = vmatpush1.bf16.msra.mxu0 0
      %1515 = vmatprep.subr.bf16.mxu0 0
      %1516 = vmatpush1.bf16.msra.mxu0 0
      %1517 = vmatprep.subr.bf16.mxu0 0
      %1518 = vmatpush1.bf16.msra.mxu0 0
      %1519 = vmatprep.subr.bf16.mxu0 0
      %1520 = vmatpush1.bf16.msra.mxu0 0
      %1521 = vmatprep.mubr.bf16.mxu0 0
      %1522 = vmatmul.mubr.bf16.gmra.mrb[0].mxu0 %v1478
      %v1523 = vpop.f32.mrb[0].mxu0
      %v1524 = vadd.f32 0.0, %v1523
      %v1525 = vpop.f32.mrb[0].mxu0
      %v1526 = vadd.f32 0.0, %v1525
      %v1527 = vpop.f32.mrb[0].mxu0
      %v1528 = vpop.f32.mrb[0].mxu0
      %1529 = vdwg.mxu0
      %1530 = vmatprep.subr.bf16.mxu0 0
      %1531 = vmatpush1.bf16.msra.mxu0 %v1487
      %1532 = vmatprep.subr.bf16.mxu0 0
      %1533 = vmatpush1.bf16.msra.mxu0 0
      %1534 = vmatprep.subr.bf16.mxu0 0
      %1535 = vmatpush1.bf16.msra.mxu0 0
      %1536 = vmatprep.subr.bf16.mxu0 0
      %1537 = vmatpush1.bf16.msra.mxu0 0
      %1538 = vmatprep.subr.bf16.mxu0 0
      %1539 = vmatpush1.bf16.msra.mxu0 0
      %1540 = vmatprep.subr.bf16.mxu0 0
      %1541 = vmatpush1.bf16.msra.mxu0 0
      %1542 = vmatprep.subr.bf16.mxu0 0
      %1543 = vmatpush1.bf16.msra.mxu0 0
      %1544 = vmatprep.subr.bf16.mxu0 0
      %1545 = vmatpush1.bf16.msra.mxu0 0
      %1546 = vmatprep.subr.bf16.mxu0 0
      %1547 = vmatpush1.bf16.msra.mxu0 0
      %1548 = vmatprep.subr.bf16.mxu0 0
      %1549 = vmatpush1.bf16.msra.mxu0 0
      %1550 = vmatprep.subr.bf16.mxu0 0
      %1551 = vmatpush1.bf16.msra.mxu0 0
      %1552 = vmatprep.subr.bf16.mxu0 0
      %1553 = vmatpush1.bf16.msra.mxu0 0
      %1554 = vmatprep.subr.bf16.mxu0 0
      %1555 = vmatpush1.bf16.msra.mxu0 0
      %1556 = vmatprep.subr.bf16.mxu0 0
      %1557 = vmatpush1.bf16.msra.mxu0 0
      %1558 = vmatprep.subr.bf16.mxu0 0
      %1559 = vmatpush1.bf16.msra.mxu0 0
      %1560 = vmatprep.subr.bf16.mxu0 0
      %1561 = vmatpush1.bf16.msra.mxu0 0
      %1562 = vmatprep.mubr.bf16.mxu0 0
      %1563 = vmatmul.mubr.bf16.gmra.mrb[0].mxu0 %v1478
      %v1564 = vpop.f32.mrb[0].mxu0
      %v1565 = vadd.f32 0.0, %v1564
      %v1566 = vpop.f32.mrb[0].mxu0
      %v1567 = vpop.f32.mrb[0].mxu0
      %v1568 = vpop.f32.mrb[0].mxu0
      %1569 = vdwg.mxu0
      %v1570 = vadd.f32 %v1460, %v1524
      %v1571 = vadd.f32 %v1461, %v1526
      %v1572 = vadd.f32 %v1462, %v1565
      %s1573 = scalar_lea.vmem %s1, 28
      %v1574 = vld [vmem:[%s1573] sm:$0x3]
      %v1576 = vsel %vm201, %v1574, 0
      %1578 = vmatprep.subr.bf16.mxu0 %v1484
      %1579 = vmatpush1.bf16.msra.mxu0 %v1481
      %1580 = vmatprep.subr.bf16.mxu0 0
      %1581 = vmatpush1.bf16.msra.mxu0 0
      %1582 = vmatprep.subr.bf16.mxu0 0
      %1583 = vmatpush1.bf16.msra.mxu0 0
      %1584 = vmatprep.subr.bf16.mxu0 0
      %1585 = vmatpush1.bf16.msra.mxu0 0
      %1586 = vmatprep.subr.bf16.mxu0 0
      %1587 = vmatpush1.bf16.msra.mxu0 0
      %1588 = vmatprep.subr.bf16.mxu0 0
      %1589 = vmatpush1.bf16.msra.mxu0 0
      %1590 = vmatprep.subr.bf16.mxu0 0
      %1591 = vmatpush1.bf16.msra.mxu0 0
      %1592 = vmatprep.subr.bf16.mxu0 0
      %1593 = vmatpush1.bf16.msra.mxu0 0
      %1594 = vmatprep.subr.bf16.mxu0 0
      %1595 = vmatpush1.bf16.msra.mxu0 0
      %1596 = vmatprep.subr.bf16.mxu0 0
      %1597 = vmatpush1.bf16.msra.mxu0 0
      %1598 = vmatprep.subr.bf16.mxu0 0
      %1599 = vmatpush1.bf16.msra.mxu0 0
      %1600 = vmatprep.subr.bf16.mxu0 0
      %1601 = vmatpush1.bf16.msra.mxu0 0
      %1602 = vmatprep.subr.bf16.mxu0 0
      %1603 = vmatpush1.bf16.msra.mxu0 0
      %1604 = vmatprep.subr.bf16.mxu0 0
      %1605 = vmatpush1.bf16.msra.mxu0 0
      %1606 = vmatprep.subr.bf16.mxu0 0
      %1607 = vmatpush1.bf16.msra.mxu0 0
      %1608 = vmatprep.subr.bf16.mxu0 0
      %1609 = vmatpush1.bf16.msra.mxu0 0
      %1610 = vmatprep.mubr.bf16.mxu0 0
      %1611 = vmatmul.mubr.bf16.gmra.mrb[0].mxu0 %v1576
      %v1612 = vpop.f32.mrb[0].mxu0
      %v1613 = vadd.f32 0.0, %v1612
      %v1614 = vpop.f32.mrb[0].mxu0
      %v1615 = vadd.f32 0.0, %v1614
      %v1616 = vpop.f32.mrb[0].mxu0
      %v1617 = vpop.f32.mrb[0].mxu0
      %1618 = vdwg.mxu0
      %1619 = vmatprep.subr.bf16.mxu0 0
      %1620 = vmatpush1.bf16.msra.mxu0 %v1487
      %1621 = vmatprep.subr.bf16.mxu0 0
      %1622 = vmatpush1.bf16.msra.mxu0 0
      %1623 = vmatprep.subr.bf16.mxu0 0
      %1624 = vmatpush1.bf16.msra.mxu0 0
      %1625 = vmatprep.subr.bf16.mxu0 0
      %1626 = vmatpush1.bf16.msra.mxu0 0
      %1627 = vmatprep.subr.bf16.mxu0 0
      %1628 = vmatpush1.bf16.msra.mxu0 0
      %1629 = vmatprep.subr.bf16.mxu0 0
      %1630 = vmatpush1.bf16.msra.mxu0 0
      %1631 = vmatprep.subr.bf16.mxu0 0
      %1632 = vmatpush1.bf16.msra.mxu0 0
      %1633 = vmatprep.subr.bf16.mxu0 0
      %1634 = vmatpush1.bf16.msra.mxu0 0
      %1635 = vmatprep.subr.bf16.mxu0 0
      %1636 = vmatpush1.bf16.msra.mxu0 0
      %1637 = vmatprep.subr.bf16.mxu0 0
      %1638 = vmatpush1.bf16.msra.mxu0 0
      %1639 = vmatprep.subr.bf16.mxu0 0
      %1640 = vmatpush1.bf16.msra.mxu0 0
      %1641 = vmatprep.subr.bf16.mxu0 0
      %1642 = vmatpush1.bf16.msra.mxu0 0
      %1643 = vmatprep.subr.bf16.mxu0 0
      %1644 = vmatpush1.bf16.msra.mxu0 0
      %1645 = vmatprep.subr.bf16.mxu0 0
      %1646 = vmatpush1.bf16.msra.mxu0 0
      %1647 = vmatprep.subr.bf16.mxu0 0
      %1648 = vmatpush1.bf16.msra.mxu0 0
      %1649 = vmatprep.subr.bf16.mxu0 0
      %1650 = vmatpush1.bf16.msra.mxu0 0
      %1651 = vmatprep.mubr.bf16.mxu0 0
      %1652 = vmatmul.mubr.bf16.gmra.mrb[0].mxu0 %v1576
      %v1653 = vpop.f32.mrb[0].mxu0
      %v1654 = vadd.f32 0.0, %v1653
      %v1655 = vpop.f32.mrb[0].mxu0
      %v1656 = vpop.f32.mrb[0].mxu0
      %v1657 = vpop.f32.mrb[0].mxu0
      %1658 = vdwg.mxu0
      %v1659 = vadd.f32 %v1307, %v1613
      %v1660 = vadd.f32 %v1309, %v1615
      %v1661 = vadd.f32 %v1348, %v1654
      %s1662 = scalar_lea.vmem %s1, 30
      %v1663 = vld [vmem:[%s1662] sm:$0x3]
      %1664 = vrot.lane.b32.xlu0 %v185, 90
      %v1665 = vpop.permute.xlu0 %1664
      %1666 = vrot.lane.b32.xlu0 %v186, 90
      %v1667 = vpop.permute.xlu0 %1666
      %1668 = vrot.lane.b32.xlu0 %v187, 90
      %v1669 = vpop.permute.xlu0 %1668
      %1670 = vrot.lane.b32.xlu0 %v188, 90
      %v1671 = vpop.permute.xlu0 %1670
      %vm1672 = vcmask 736256
      %v1673 = vsel %vm1672, %v1665, %v1667
      %v1674 = vsel %vm1672, %v1667, %v1669
      %v1675 = vsel %vm1672, %v1669, %v1671
      %v1677 = vsel %vm201, %v1663, 0
      %v1680 = vsel %vm205, %v1673, 0
      %v1683 = vsel %vm205, %v1674, 0
      %v1686 = vsel %vm205, %v1675, 0
      %1688 = vmatprep.subr.bf16.mxu0 %v1683
      %1689 = vmatpush1.bf16.msra.mxu0 %v1680
      %1690 = vmatprep.subr.bf16.mxu0 0
      %1691 = vmatpush1.bf16.msra.mxu0 0
      %1692 = vmatprep.subr.bf16.mxu0 0
      %1693 = vmatpush1.bf16.msra.mxu0 0
      %1694 = vmatprep.subr.bf16.mxu0 0
      %1695 = vmatpush1.bf16.msra.mxu0 0
      %1696 = vmatprep.subr.bf16.mxu0 0
      %1697 = vmatpush1.bf16.msra.mxu0 0
      %1698 = vmatprep.subr.bf16.mxu0 0
      %1699 = vmatpush1.bf16.msra.mxu0 0
      %1700 = vmatprep.subr.bf16.mxu0 0
      %1701 = vmatpush1.bf16.msra.mxu0 0
      %1702 = vmatprep.subr.bf16.mxu0 0
      %1703 = vmatpush1.bf16.msra.mxu0 0
      %1704 = vmatprep.subr.bf16.mxu0 0
      %1705 = vmatpush1.bf16.msra.mxu0 0
      %1706 = vmatprep.subr.bf16.mxu0 0
      %1707 = vmatpush1.bf16.msra.mxu0 0
      %1708 = vmatprep.subr.bf16.mxu0 0
      %1709 = vmatpush1.bf16.msra.mxu0 0
      %1710 = vmatprep.subr.bf16.mxu0 0
      %1711 = vmatpush1.bf16.msra.mxu0 0
      %1712 = vmatprep.subr.bf16.mxu0 0
      %1713 = vmatpush1.bf16.msra.mxu0 0
      %1714 = vmatprep.subr.bf16.mxu0 0
      %1715 = vmatpush1.bf16.msra.mxu0 0
      %1716 = vmatprep.subr.bf16.mxu0 0
      %1717 = vmatpush1.bf16.msra.mxu0 0
      %1718 = vmatprep.subr.bf16.mxu0 0
      %1719 = vmatpush1.bf16.msra.mxu0 0
      %1720 = vmatprep.mubr.bf16.mxu0 0
      %1721 = vmatmul.mubr.bf16.gmra.mrb[0].mxu0 %v1677
      %v1722 = vpop.f32.mrb[0].mxu0
      %v1723 = vadd.f32 0.0, %v1722
      %v1724 = vpop.f32.mrb[0].mxu0
      %v1725 = vadd.f32 0.0, %v1724
      %v1726 = vpop.f32.mrb[0].mxu0
      %v1727 = vpop.f32.mrb[0].mxu0
      %1728 = vdwg.mxu0
      %1729 = vmatprep.subr.bf16.mxu0 0
      %1730 = vmatpush1.bf16.msra.mxu0 %v1686
      %1731 = vmatprep.subr.bf16.mxu0 0
      %1732 = vmatpush1.bf16.msra.mxu0 0
      %1733 = vmatprep.subr.bf16.mxu0 0
      %1734 = vmatpush1.bf16.msra.mxu0 0
      %1735 = vmatprep.subr.bf16.mxu0 0
      %1736 = vmatpush1.bf16.msra.mxu0 0
      %1737 = vmatprep.subr.bf16.mxu0 0
      %1738 = vmatpush1.bf16.msra.mxu0 0
      %1739 = vmatprep.subr.bf16.mxu0 0
      %1740 = vmatpush1.bf16.msra.mxu0 0
      %1741 = vmatprep.subr.bf16.mxu0 0
      %1742 = vmatpush1.bf16.msra.mxu0 0
      %1743 = vmatprep.subr.bf16.mxu0 0
      %1744 = vmatpush1.bf16.msra.mxu0 0
      %1745 = vmatprep.subr.bf16.mxu0 0
      %1746 = vmatpush1.bf16.msra.mxu0 0
      %1747 = vmatprep.subr.bf16.mxu0 0
      %1748 = vmatpush1.bf16.msra.mxu0 0
      %1749 = vmatprep.subr.bf16.mxu0 0
      %1750 = vmatpush1.bf16.msra.mxu0 0
      %1751 = vmatprep.subr.bf16.mxu0 0
      %1752 = vmatpush1.bf16.msra.mxu0 0
      %1753 = vmatprep.subr.bf16.mxu0 0
      %1754 = vmatpush1.bf16.msra.mxu0 0
      %1755 = vmatprep.subr.bf16.mxu0 0
      %1756 = vmatpush1.bf16.msra.mxu0 0
      %1757 = vmatprep.subr.bf16.mxu0 0
      %1758 = vmatpush1.bf16.msra.mxu0 0
      %1759 = vmatprep.subr.bf16.mxu0 0
      %1760 = vmatpush1.bf16.msra.mxu0 0
      %1761 = vmatprep.mubr.bf16.mxu0 0
      %1762 = vmatmul.mubr.bf16.gmra.mrb[0].mxu0 %v1677
      %v1763 = vpop.f32.mrb[0].mxu0
      %v1764 = vadd.f32 0.0, %v1763
      %v1765 = vpop.f32.mrb[0].mxu0
      %v1766 = vpop.f32.mrb[0].mxu0
      %v1767 = vpop.f32.mrb[0].mxu0
      %1768 = vdwg.mxu0
      %v1769 = vadd.f32 %v1659, %v1723
      %v1770 = vadd.f32 %v1660, %v1725
      %v1771 = vadd.f32 %v1661, %v1764
      %v1772 = vld [vmem:[%s2] sm:$0x7]
      %1774 = vset.pattern.permute.xlu0 0
      %1775 = vperm.xlu0 %1774, %v1772
      %v1776 = vpop.permute.xlu0 %1775
      %v1778 = vadd.f32 %v809, %v1776
      %v1779 = vadd.f32 %v810, %v1776
      %v1780 = vadd.f32 %v811, %v1776
      %v1781 = vtanh.pop %v1778
      %v1782 = vtanh.pop %v1779
      %v1783 = vtanh.pop %v1780
      %v1786 = vcombine.low %v1781, %v1782
      %1788 = vst [vmem:[%s170] sm:$0x77] %v1786
      %1789 = vst [vmem:[%s170 + $0x8] sm:$0x7] %v1783
      %v1790 = vadd.f32 %v1180, %v1776
      %v1791 = vadd.f32 %v1181, %v1776
      %v1792 = vadd.f32 %v1182, %v1776
      %v1793 = vtanh.pop %v1790
      %v1794 = vtanh.pop %v1791
      %v1795 = vtanh.pop %v1792
      %v1798 = vcombine.low %v1793, %v1794
      %s1800 = scalar_lea.vmem %s170, 12
      %1801 = vst [vmem:[%s1800] sm:$0x77] %v1798
      %1802 = vst [vmem:[%s1800 + $0x8] sm:$0x7] %v1795
      %v1803 = vadd.f32 %v1570, %v1776
      %v1804 = vadd.f32 %v1571, %v1776
      %v1805 = vadd.f32 %v1572, %v1776
      %v1806 = vtanh.pop %v1803
      %v1807 = vtanh.pop %v1804
      %v1808 = vtanh.pop %v1805
      %v1811 = vcombine.low %v1806, %v1807
      %s1813 = scalar_lea.vmem %s170, 24
      %1814 = vst [vmem:[%s1813] sm:$0x77] %v1811
      %1815 = vst [vmem:[%s1813 + $0x8] sm:$0x7] %v1808
      %v1816 = vadd.f32 %v1769, %v1776
      %v1817 = vadd.f32 %v1770, %v1776
      %v1818 = vadd.f32 %v1771, %v1776
      %v1819 = vtanh.pop %v1816
      %v1820 = vtanh.pop %v1817
      %v1821 = vtanh.pop %v1818
      %v1824 = vcombine.low %v1819, %v1820
      %s1826 = scalar_lea.vmem %s170, 36
      %1827 = vst [vmem:[%s1826] sm:$0x77] %v1824
      %1828 = vst [vmem:[%s1826 + $0x8] sm:$0x7] %v1821
      %p1829 = scmp.lt.s32.totalorder %s14, 1
      %s1830 = scalar_select %p1829, %s14, 1
      %s1831 = smul.addr %s1830, 12
      %s1832 = smul.addr %s1831, 4
      %s1833 = scalar_lea.vmem %s3, %s1832
      // Predicated region
      $region33: #{tpu_custom_call.1} parent=31 // pred_check
        %p1834 = pneg %p100
      $region34: #{tpu_custom_call.1} parent=31 // pred_check_branch
        %1836 = sbr.rel (%p1834) target = $region36
      $region35: #{tpu_custom_call.1} parent=31 // pred_region
        _
      $region36: #{tpu_custom_call.1} parent=31 // pred_fallthru
        _
    $region32: #{tpu_custom_call.1} parent=5 // pred_fallthru
      _
    %p1837 = scmp.le.s32.totalorder 2, %s9
    // Predicated region
    $region37: #{tpu_custom_call.1} parent=5 // pred_check
      %p1838 = pneg %p1837
    $region38: #{tpu_custom_call.1} parent=5 // pred_check_branch
      %1840 = sbr.rel (%p1838) target = $region40
    $region39: #{tpu_custom_call.1} parent=5 // pred_region
      %s1841 = ssub.s32 %s9, 2
      // Predicated region
      $region41: #{tpu_custom_call.1} parent=39 // pred_check
        %p1842 = pneg %p106
      $region42: #{tpu_custom_call.1} parent=39 // pred_check_branch
        %1844 = sbr.rel (%p1842) target = $region44
      $region43: #{tpu_custom_call.1} parent=39 // pred_region
        %p1845 = scmp.lt.s32.totalorder %s15, 1
        %s1846 = scalar_select %p1845, %s15, 1
        %s1847 = smul.addr %s1846, 12
        %s1848 = smul.addr %s1847, 4
        %s1849 = scalar_lea.vmem %s3, %s1848
      $region44: #{tpu_custom_call.1} parent=39 // pred_fallthru
        _
    $region40: #{tpu_custom_call.1} parent=5 // pred_fallthru
      _
  $region6: #{tpu_custom_call.1} parent=0 // loop_footer
    %s13 = sadd.s32 1, %s9
  $region7: #{tpu_custom_call.1} parent=0 // loop_footer_branch
    %8 = sbr.rel target = $region3
  $region8: #{tpu_custom_call.1} parent=0 // loop_exit
    _

</llo_original>
